<compile_context>
chip_gen: v7x
topology: tpu7x:2x2x1
jax: 0.10.0
libtpu: 0.0.40
codegen_flags: <defaults>
</compile_context>

<pallas_src>
import functools

import jax
import jax.numpy as jnp
from jax.experimental import pallas as pl
from jax.experimental.pallas import tpu as pltpu

NUM_STAGES = 4


def _features_kernel(x_ref, wt_ref, b_ref, g_ref, beta_ref,
                     o0_ref, o1_ref, o2_ref, o3_ref, *, eps):
    """All four fused (Linear -> GELU -> LayerNorm) stages on one tile.

    Channels-first layout:
      x_ref        : (1, C, T)  input tile (channels on sublanes, pixels on lanes)
      wt_ref       : (4, C, C)  stacked transposed weights (bf16): y^T = W^T @ x^T
      b/g/beta_ref : (4, C, 1)  per-stage bias / LN gamma / LN beta (f32)
      oS_ref       : (1, C, T)  stage-S output tile (NCHW-ordered -> lane-dense)
    """
    out_refs = (o0_ref, o1_ref, o2_ref, o3_ref)
    cur = x_ref[0].astype(jnp.float32)                        # (C, T) f32
    for s in range(NUM_STAGES):                               # unrolled
        # MXU in bf16, accumulate in f32.
        y = jnp.dot(wt_ref[s], cur.astype(jnp.bfloat16),
                    preferred_element_type=jnp.float32)       # (C, T)
        y = y + b_ref[s]                                      # (C, 1) broadcast
        y = jax.nn.gelu(y, approximate=True)                  # f32 on VPU/EUP
        # LayerNorm over the channel axis (axis 0 in this layout).
        mean = jnp.mean(y, axis=0, keepdims=True)             # (1, T)
        var = jnp.mean(jnp.square(y - mean), axis=0, keepdims=True)
        z = (y - mean) * jax.lax.rsqrt(var + eps)
        cur = z * g_ref[s] + beta_ref[s]                      # feeds next stage
        out_refs[s][0] = cur.astype(out_refs[s].dtype)        # lane-dense store


def features_forward(x_nhwc, params, *, max_tile=512, eps=1e-5):
    """Pallas Features.forward: returns the 4 stage outputs in NCHW layout."""
    N, H, W, C = x_nhwc.shape
    HW = H * W
    # Pixel tile: full H*W when small, otherwise a 128-aligned chunk
    # (cdiv grid + Pallas edge-block masking handles any remainder).
    t = HW if HW <= max_tile else max(128, (max_tile // 128) * 128)
    n_t = pl.cdiv(HW, t)

    # Channels-first input view (N, C, HW): the module's final permute is now
    # a free reshape and every kernel store has a lane-dense (>=128) last dim.
    x_t = jnp.transpose(x_nhwc.reshape(N, HW, C), (0, 2, 1))

    wt = jnp.stack([p["w"].T for p in params])                # (4, C, C) bf16
    b = jnp.stack([p["b"].reshape(C, 1) for p in params])     # (4, C, 1) f32
    g = jnp.stack([p["gamma"].reshape(C, 1) for p in params])
    bt = jnp.stack([p["beta"].reshape(C, 1) for p in params])

    const = lambda n, j: (0, 0, 0)                            # grid-invariant operands
    out_spec = pl.BlockSpec((1, C, t), lambda n, j: (n, 0, j))

    outs = pl.pallas_call(
        functools.partial(_features_kernel, eps=eps),
        out_shape=tuple(jax.ShapeDtypeStruct((N, C, HW), x_nhwc.dtype)
                        for _ in range(NUM_STAGES)),
        grid_spec=pltpu.PrefetchScalarGridSpec(
            num_scalar_prefetch=0,
            grid=(N, n_t),
            in_specs=[
                pl.BlockSpec((1, C, t), lambda n, j: (n, 0, j)),   # activations
                pl.BlockSpec((NUM_STAGES, C, C), const),           # weights (bf16)
                pl.BlockSpec((NUM_STAGES, C, 1), const),           # biases
                pl.BlockSpec((NUM_STAGES, C, 1), const),           # LN gamma
                pl.BlockSpec((NUM_STAGES, C, 1), const),           # LN beta
            ],
            out_specs=[out_spec] * NUM_STAGES,
        ),
        compiler_params=pltpu.CompilerParams(
            dimension_semantics=("parallel", "parallel")),
    )(x_t, wt, b, g, bt)

    # (N, C, H*W) -> (N, C, H, W): free reshape == x_i.permute((0, 3, 1, 2)).
    return tuple(o.reshape(N, C, H, W) for o in outs)


def features_forward_ref(x_nhwc, params, *, eps=1e-5):
    """Pure-JAX reference (same math, pixel-major layout) for checking."""
    N, H, W, C = x_nhwc.shape
    cur = x_nhwc.reshape(N * H * W, C).astype(jnp.float32)
    outs = []
    for p in params:
        y = jnp.dot(cur.astype(jnp.bfloat16), p["w"],
                    preferred_element_type=jnp.float32)
        y = y + p["b"]
        y = jax.nn.gelu(y, approximate=True)
        mean = jnp.mean(y, axis=-1, keepdims=True)
        var = jnp.mean(jnp.square(y - mean), axis=-1, keepdims=True)
        z = (y - mean) * jax.lax.rsqrt(var + eps)
        cur = z * p["gamma"] + p["beta"]
        outs.append(cur.reshape(N, H, W, C))
    return tuple(o.transpose(0, 3, 1, 2).astype(x_nhwc.dtype) for o in outs)


def make_params(key, C, n_stages=NUM_STAGES):
    """Synthetic per-stage parameters: Linear(C->C) + GELU, then LayerNorm(C)."""
    # TODO(synk): the real `net_layers` sub-modules are injected at runtime in
    # PyTorch; we substitute deterministic Linear+GELU / LayerNorm stages.
    params = []
    for _ in range(n_stages):
        key, kw, kb = jax.random.split(key, 3)
        w = jax.random.normal(kw, (C, C), jnp.float32) * (1.0 / jnp.sqrt(C))
        params.append({
            "w": w.astype(jnp.bfloat16),                      # MXU-native dtype
            "b": jax.random.normal(kb, (1, C), jnp.float32) * 0.02,
            "gamma": jnp.ones((1, C), jnp.float32),
            "beta": jnp.zeros((1, C), jnp.float32),
        })
    return params


if __name__ == "__main__":
    key = jax.random.PRNGKey(0)
    kx, kp = jax.random.split(key)

    # Small NHWC input: batch=2, 16x16 spatial, 32 channels.
    N, H, W, C = 2, 16, 16, 32
    x = jax.random.normal(kx, (N, H, W, C), jnp.float32)
    params = make_params(kp, C)

    outs = jax.block_until_ready(features_forward(x, params))
    refs = features_forward_ref(x, params)
    for o, r in zip(outs, refs):
        assert o.shape == (N, C, H, W)
        assert jnp.allclose(o, r, atol=5e-3, rtol=5e-3), \
            float(jnp.max(jnp.abs(o - r)))

    print("KERNEL_OK")
</pallas_src>

<mosaic_0001>
module attributes {stable_mosaic.version = 11 : i64} {
  func.func @_features_kernel(%arg0: i32, %arg1: i32, %arg2: memref<1x32x256xf32, #tpu.memory_space<vmem>>, %arg3: memref<4x32x32xbf16, #tpu.memory_space<vmem>>, %arg4: memref<4x32x1xf32, #tpu.memory_space<vmem>>, %arg5: memref<4x32x1xf32, #tpu.memory_space<vmem>>, %arg6: memref<4x32x1xf32, #tpu.memory_space<vmem>>, %arg7: memref<1x32x256xf32, #tpu.memory_space<vmem>>, %arg8: memref<1x32x256xf32, #tpu.memory_space<vmem>>, %arg9: memref<1x32x256xf32, #tpu.memory_space<vmem>>, %arg10: memref<1x32x256xf32, #tpu.memory_space<vmem>>) attributes {dimension_semantics = [#tpu.dimension_semantics<parallel>, #tpu.dimension_semantics<parallel>], iteration_bounds = array<i64: 2, 1>, scalar_prefetch = 0 : i64, scratch_operands = 0 : i64, tpu.core_type = #tpu.core_type<tc>, window_params = [{transform_indices = @transform_0, window_bounds = array<i64: 1, 32, 256>}, {pipeline_mode = #tpu.pipeline_mode<synchronous>, transform_indices = @transform_1, window_bounds = array<i64: 4, 32, 32>}, {pipeline_mode = #tpu.pipeline_mode<synchronous>, transform_indices = @transform_2, window_bounds = array<i64: 4, 32, 1>}, {pipeline_mode = #tpu.pipeline_mode<synchronous>, transform_indices = @transform_3, window_bounds = array<i64: 4, 32, 1>}, {pipeline_mode = #tpu.pipeline_mode<synchronous>, transform_indices = @transform_4, window_bounds = array<i64: 4, 32, 1>}, {transform_indices = @transform_5, window_bounds = array<i64: 1, 32, 256>}, {transform_indices = @transform_6, window_bounds = array<i64: 1, 32, 256>}, {transform_indices = @transform_7, window_bounds = array<i64: 1, 32, 256>}, {transform_indices = @transform_8, window_bounds = array<i64: 1, 32, 256>}]} {
    %c0 = arith.constant 0 : index
    %c0_0 = arith.constant 0 : index
    %c0_1 = arith.constant 0 : index
    %0 = vector.load %arg2[%c0, %c0_0, %c0_1] : memref<1x32x256xf32, #tpu.memory_space<vmem>>, vector<1x32x256xf32>
    %1 = vector.shape_cast %0 : vector<1x32x256xf32> to vector<32x256xf32>
    %c0_2 = arith.constant 0 : index
    %c0_3 = arith.constant 0 : index
    %c0_4 = arith.constant 0 : index
    %2 = vector.load %arg3[%c0_2, %c0_3, %c0_4] : memref<4x32x32xbf16, #tpu.memory_space<vmem>>, vector<1x32x32xbf16>
    %3 = vector.shape_cast %2 : vector<1x32x32xbf16> to vector<32x32xbf16>
    %4 = arith.truncf %1 : vector<32x256xf32> to vector<32x256xbf16>
    %cst = arith.constant dense<0.000000e+00> : vector<32x256xf32>
    %5 = tpu.matmul %3, %4, %cst {dimension_numbers = #tpu.dot_dimension_numbers<[1], [0], [0], [1], [0, 0, 1, 1], [], []>} : vector<32x32xbf16>, vector<32x256xbf16>, vector<32x256xf32> -> vector<32x256xf32>
    %c0_5 = arith.constant 0 : index
    %c0_6 = arith.constant 0 : index
    %c0_7 = arith.constant 0 : index
    %6 = vector.load %arg4[%c0_5, %c0_6, %c0_7] : memref<4x32x1xf32, #tpu.memory_space<vmem>>, vector<1x32x1xf32>
    %7 = vector.shape_cast %6 : vector<1x32x1xf32> to vector<32x1xf32>
    %8 = vector.broadcast %7 : vector<32x1xf32> to vector<32x256xf32>
    %9 = arith.addf %5, %8 : vector<32x256xf32>
    %10 = arith.mulf %9, %9 : vector<32x256xf32>
    %11 = arith.mulf %9, %10 : vector<32x256xf32>
    %cst_8 = arith.constant 4.471500e-02 : f32
    %12 = vector.broadcast %cst_8 : f32 to vector<32x256xf32>
    %13 = arith.mulf %12, %11 : vector<32x256xf32>
    %14 = arith.addf %9, %13 : vector<32x256xf32>
    %cst_9 = arith.constant 0.797884583 : f32
    %15 = vector.broadcast %cst_9 : f32 to vector<32x256xf32>
    %16 = arith.mulf %15, %14 : vector<32x256xf32>
    %17 = math.tanh %16 : vector<32x256xf32>
    %cst_10 = arith.constant 1.000000e+00 : f32
    %18 = vector.broadcast %cst_10 : f32 to vector<32x256xf32>
    %19 = arith.addf %18, %17 : vector<32x256xf32>
    %cst_11 = arith.constant 5.000000e-01 : f32
    %20 = vector.broadcast %cst_11 : f32 to vector<32x256xf32>
    %21 = arith.mulf %20, %19 : vector<32x256xf32>
    %22 = arith.mulf %9, %21 : vector<32x256xf32>
    %cst_12 = arith.constant dense<0.000000e+00> : vector<256xf32>
    %23 = vector.multi_reduction <add>, %22, %cst_12 [0] : vector<32x256xf32> to vector<256xf32>
    %24 = vector.shape_cast %23 : vector<256xf32> to vector<1x256xf32>
    %cst_13 = arith.constant 3.200000e+01 : f32
    %25 = vector.broadcast %cst_13 : f32 to vector<1x256xf32>
    %26 = arith.divf %24, %25 : vector<1x256xf32>
    %27 = vector.broadcast %26 : vector<1x256xf32> to vector<32x256xf32>
    %28 = arith.subf %22, %27 : vector<32x256xf32>
    %29 = arith.mulf %28, %28 : vector<32x256xf32>
    %cst_14 = arith.constant dense<0.000000e+00> : vector<256xf32>
    %30 = vector.multi_reduction <add>, %29, %cst_14 [0] : vector<32x256xf32> to vector<256xf32>
    %31 = vector.shape_cast %30 : vector<256xf32> to vector<1x256xf32>
    %cst_15 = arith.constant 3.200000e+01 : f32
    %32 = vector.broadcast %cst_15 : f32 to vector<1x256xf32>
    %33 = arith.divf %31, %32 : vector<1x256xf32>
    %34 = vector.broadcast %26 : vector<1x256xf32> to vector<32x256xf32>
    %35 = arith.subf %22, %34 : vector<32x256xf32>
    %cst_16 = arith.constant 9.99999974E-6 : f32
    %36 = vector.broadcast %cst_16 : f32 to vector<1x256xf32>
    %37 = arith.addf %33, %36 : vector<1x256xf32>
    %38 = math.rsqrt %37 : vector<1x256xf32>
    %39 = vector.broadcast %38 : vector<1x256xf32> to vector<32x256xf32>
    %40 = arith.mulf %35, %39 : vector<32x256xf32>
    %c0_17 = arith.constant 0 : index
    %c0_18 = arith.constant 0 : index
    %c0_19 = arith.constant 0 : index
    %41 = vector.load %arg5[%c0_17, %c0_18, %c0_19] : memref<4x32x1xf32, #tpu.memory_space<vmem>>, vector<1x32x1xf32>
    %42 = vector.shape_cast %41 : vector<1x32x1xf32> to vector<32x1xf32>
    %43 = vector.broadcast %42 : vector<32x1xf32> to vector<32x256xf32>
    %44 = arith.mulf %40, %43 : vector<32x256xf32>
    %c0_20 = arith.constant 0 : index
    %c0_21 = arith.constant 0 : index
    %c0_22 = arith.constant 0 : index
    %45 = vector.load %arg6[%c0_20, %c0_21, %c0_22] : memref<4x32x1xf32, #tpu.memory_space<vmem>>, vector<1x32x1xf32>
    %46 = vector.shape_cast %45 : vector<1x32x1xf32> to vector<32x1xf32>
    %47 = vector.broadcast %46 : vector<32x1xf32> to vector<32x256xf32>
    %48 = arith.addf %44, %47 : vector<32x256xf32>
    %c0_23 = arith.constant 0 : index
    %c0_24 = arith.constant 0 : index
    %c0_25 = arith.constant 0 : index
    %49 = vector.load %arg7[%c0_23, %c0_24, %c0_25] : memref<1x32x256xf32, #tpu.memory_space<vmem>>, vector<1x32x256xf32>
    %50 = vector.shape_cast %49 : vector<1x32x256xf32> to vector<32x256xf32>
    %51 = vector.shape_cast %48 : vector<32x256xf32> to vector<1x32x256xf32>
    tpu.vector_store %arg7[%c0_23, %c0_24, %c0_25], %51 {strides = array<i32>} : memref<1x32x256xf32, #tpu.memory_space<vmem>>, vector<1x32x256xf32>,
    %c1 = arith.constant 1 : index
    %c0_26 = arith.constant 0 : index
    %c0_27 = arith.constant 0 : index
    %52 = vector.load %arg3[%c1, %c0_26, %c0_27] : memref<4x32x32xbf16, #tpu.memory_space<vmem>>, vector<1x32x32xbf16>
    %53 = vector.shape_cast %52 : vector<1x32x32xbf16> to vector<32x32xbf16>
    %54 = arith.truncf %48 : vector<32x256xf32> to vector<32x256xbf16>
    %cst_28 = arith.constant dense<0.000000e+00> : vector<32x256xf32>
    %55 = tpu.matmul %53, %54, %cst_28 {dimension_numbers = #tpu.dot_dimension_numbers<[1], [0], [0], [1], [0, 0, 1, 1], [], []>} : vector<32x32xbf16>, vector<32x256xbf16>, vector<32x256xf32> -> vector<32x256xf32>
    %c1_29 = arith.constant 1 : index
    %c0_30 = arith.constant 0 : index
    %c0_31 = arith.constant 0 : index
    %56 = vector.load %arg4[%c1_29, %c0_30, %c0_31] : memref<4x32x1xf32, #tpu.memory_space<vmem>>, vector<1x32x1xf32>
    %57 = vector.shape_cast %56 : vector<1x32x1xf32> to vector<32x1xf32>
    %58 = vector.broadcast %57 : vector<32x1xf32> to vector<32x256xf32>
    %59 = arith.addf %55, %58 : vector<32x256xf32>
    %60 = arith.mulf %59, %59 : vector<32x256xf32>
    %61 = arith.mulf %59, %60 : vector<32x256xf32>
    %cst_32 = arith.constant 4.471500e-02 : f32
    %62 = vector.broadcast %cst_32 : f32 to vector<32x256xf32>
    %63 = arith.mulf %62, %61 : vector<32x256xf32>
    %64 = arith.addf %59, %63 : vector<32x256xf32>
    %cst_33 = arith.constant 0.797884583 : f32
    %65 = vector.broadcast %cst_33 : f32 to vector<32x256xf32>
    %66 = arith.mulf %65, %64 : vector<32x256xf32>
    %67 = math.tanh %66 : vector<32x256xf32>
    %cst_34 = arith.constant 1.000000e+00 : f32
    %68 = vector.broadcast %cst_34 : f32 to vector<32x256xf32>
    %69 = arith.addf %68, %67 : vector<32x256xf32>
    %cst_35 = arith.constant 5.000000e-01 : f32
    %70 = vector.broadcast %cst_35 : f32 to vector<32x256xf32>
    %71 = arith.mulf %70, %69 : vector<32x256xf32>
    %72 = arith.mulf %59, %71 : vector<32x256xf32>
    %cst_36 = arith.constant dense<0.000000e+00> : vector<256xf32>
    %73 = vector.multi_reduction <add>, %72, %cst_36 [0] : vector<32x256xf32> to vector<256xf32>
    %74 = vector.shape_cast %73 : vector<256xf32> to vector<1x256xf32>
    %cst_37 = arith.constant 3.200000e+01 : f32
    %75 = vector.broadcast %cst_37 : f32 to vector<1x256xf32>
    %76 = arith.divf %74, %75 : vector<1x256xf32>
    %77 = vector.broadcast %76 : vector<1x256xf32> to vector<32x256xf32>
    %78 = arith.subf %72, %77 : vector<32x256xf32>
    %79 = arith.mulf %78, %78 : vector<32x256xf32>
    %cst_38 = arith.constant dense<0.000000e+00> : vector<256xf32>
    %80 = vector.multi_reduction <add>, %79, %cst_38 [0] : vector<32x256xf32> to vector<256xf32>
    %81 = vector.shape_cast %80 : vector<256xf32> to vector<1x256xf32>
    %cst_39 = arith.constant 3.200000e+01 : f32
    %82 = vector.broadcast %cst_39 : f32 to vector<1x256xf32>
    %83 = arith.divf %81, %82 : vector<1x256xf32>
    %84 = vector.broadcast %76 : vector<1x256xf32> to vector<32x256xf32>
    %85 = arith.subf %72, %84 : vector<32x256xf32>
    %cst_40 = arith.constant 9.99999974E-6 : f32
    %86 = vector.broadcast %cst_40 : f32 to vector<1x256xf32>
    %87 = arith.addf %83, %86 : vector<1x256xf32>
    %88 = math.rsqrt %87 : vector<1x256xf32>
    %89 = vector.broadcast %88 : vector<1x256xf32> to vector<32x256xf32>
    %90 = arith.mulf %85, %89 : vector<32x256xf32>
    %c1_41 = arith.constant 1 : index
    %c0_42 = arith.constant 0 : index
    %c0_43 = arith.constant 0 : index
    %91 = vector.load %arg5[%c1_41, %c0_42, %c0_43] : memref<4x32x1xf32, #tpu.memory_space<vmem>>, vector<1x32x1xf32>
    %92 = vector.shape_cast %91 : vector<1x32x1xf32> to vector<32x1xf32>
    %93 = vector.broadcast %92 : vector<32x1xf32> to vector<32x256xf32>
    %94 = arith.mulf %90, %93 : vector<32x256xf32>
    %c1_44 = arith.constant 1 : index
    %c0_45 = arith.constant 0 : index
    %c0_46 = arith.constant 0 : index
    %95 = vector.load %arg6[%c1_44, %c0_45, %c0_46] : memref<4x32x1xf32, #tpu.memory_space<vmem>>, vector<1x32x1xf32>
    %96 = vector.shape_cast %95 : vector<1x32x1xf32> to vector<32x1xf32>
    %97 = vector.broadcast %96 : vector<32x1xf32> to vector<32x256xf32>
    %98 = arith.addf %94, %97 : vector<32x256xf32>
    %c0_47 = arith.constant 0 : index
    %c0_48 = arith.constant 0 : index
    %c0_49 = arith.constant 0 : index
    %99 = vector.load %arg8[%c0_47, %c0_48, %c0_49] : memref<1x32x256xf32, #tpu.memory_space<vmem>>, vector<1x32x256xf32>
    %100 = vector.shape_cast %99 : vector<1x32x256xf32> to vector<32x256xf32>
    %101 = vector.shape_cast %98 : vector<32x256xf32> to vector<1x32x256xf32>
    tpu.vector_store %arg8[%c0_47, %c0_48, %c0_49], %101 {strides = array<i32>} : memref<1x32x256xf32, #tpu.memory_space<vmem>>, vector<1x32x256xf32>,
    %c2 = arith.constant 2 : index
    %c0_50 = arith.constant 0 : index
    %c0_51 = arith.constant 0 : index
    %102 = vector.load %arg3[%c2, %c0_50, %c0_51] : memref<4x32x32xbf16, #tpu.memory_space<vmem>>, vector<1x32x32xbf16>
    %103 = vector.shape_cast %102 : vector<1x32x32xbf16> to vector<32x32xbf16>
    %104 = arith.truncf %98 : vector<32x256xf32> to vector<32x256xbf16>
    %cst_52 = arith.constant dense<0.000000e+00> : vector<32x256xf32>
    %105 = tpu.matmul %103, %104, %cst_52 {dimension_numbers = #tpu.dot_dimension_numbers<[1], [0], [0], [1], [0, 0, 1, 1], [], []>} : vector<32x32xbf16>, vector<32x256xbf16>, vector<32x256xf32> -> vector<32x256xf32>
    %c2_53 = arith.constant 2 : index
    %c0_54 = arith.constant 0 : index
    %c0_55 = arith.constant 0 : index
    %106 = vector.load %arg4[%c2_53, %c0_54, %c0_55] : memref<4x32x1xf32, #tpu.memory_space<vmem>>, vector<1x32x1xf32>
    %107 = vector.shape_cast %106 : vector<1x32x1xf32> to vector<32x1xf32>
    %108 = vector.broadcast %107 : vector<32x1xf32> to vector<32x256xf32>
    %109 = arith.addf %105, %108 : vector<32x256xf32>
    %110 = arith.mulf %109, %109 : vector<32x256xf32>
    %111 = arith.mulf %109, %110 : vector<32x256xf32>
    %cst_56 = arith.constant 4.471500e-02 : f32
    %112 = vector.broadcast %cst_56 : f32 to vector<32x256xf32>
    %113 = arith.mulf %112, %111 : vector<32x256xf32>
    %114 = arith.addf %109, %113 : vector<32x256xf32>
    %cst_57 = arith.constant 0.797884583 : f32
    %115 = vector.broadcast %cst_57 : f32 to vector<32x256xf32>
    %116 = arith.mulf %115, %114 : vector<32x256xf32>
    %117 = math.tanh %116 : vector<32x256xf32>
    %cst_58 = arith.constant 1.000000e+00 : f32
    %118 = vector.broadcast %cst_58 : f32 to vector<32x256xf32>
    %119 = arith.addf %118, %117 : vector<32x256xf32>
    %cst_59 = arith.constant 5.000000e-01 : f32
    %120 = vector.broadcast %cst_59 : f32 to vector<32x256xf32>
    %121 = arith.mulf %120, %119 : vector<32x256xf32>
    %122 = arith.mulf %109, %121 : vector<32x256xf32>
    %cst_60 = arith.constant dense<0.000000e+00> : vector<256xf32>
    %123 = vector.multi_reduction <add>, %122, %cst_60 [0] : vector<32x256xf32> to vector<256xf32>
    %124 = vector.shape_cast %123 : vector<256xf32> to vector<1x256xf32>
    %cst_61 = arith.constant 3.200000e+01 : f32
    %125 = vector.broadcast %cst_61 : f32 to vector<1x256xf32>
    %126 = arith.divf %124, %125 : vector<1x256xf32>
    %127 = vector.broadcast %126 : vector<1x256xf32> to vector<32x256xf32>
    %128 = arith.subf %122, %127 : vector<32x256xf32>
    %129 = arith.mulf %128, %128 : vector<32x256xf32>
    %cst_62 = arith.constant dense<0.000000e+00> : vector<256xf32>
    %130 = vector.multi_reduction <add>, %129, %cst_62 [0] : vector<32x256xf32> to vector<256xf32>
    %131 = vector.shape_cast %130 : vector<256xf32> to vector<1x256xf32>
    %cst_63 = arith.constant 3.200000e+01 : f32
    %132 = vector.broadcast %cst_63 : f32 to vector<1x256xf32>
    %133 = arith.divf %131, %132 : vector<1x256xf32>
    %134 = vector.broadcast %126 : vector<1x256xf32> to vector<32x256xf32>
    %135 = arith.subf %122, %134 : vector<32x256xf32>
    %cst_64 = arith.constant 9.99999974E-6 : f32
    %136 = vector.broadcast %cst_64 : f32 to vector<1x256xf32>
    %137 = arith.addf %133, %136 : vector<1x256xf32>
    %138 = math.rsqrt %137 : vector<1x256xf32>
    %139 = vector.broadcast %138 : vector<1x256xf32> to vector<32x256xf32>
    %140 = arith.mulf %135, %139 : vector<32x256xf32>
    %c2_65 = arith.constant 2 : index
    %c0_66 = arith.constant 0 : index
    %c0_67 = arith.constant 0 : index
    %141 = vector.load %arg5[%c2_65, %c0_66, %c0_67] : memref<4x32x1xf32, #tpu.memory_space<vmem>>, vector<1x32x1xf32>
    %142 = vector.shape_cast %141 : vector<1x32x1xf32> to vector<32x1xf32>
    %143 = vector.broadcast %142 : vector<32x1xf32> to vector<32x256xf32>
    %144 = arith.mulf %140, %143 : vector<32x256xf32>
    %c2_68 = arith.constant 2 : index
    %c0_69 = arith.constant 0 : index
    %c0_70 = arith.constant 0 : index
    %145 = vector.load %arg6[%c2_68, %c0_69, %c0_70] : memref<4x32x1xf32, #tpu.memory_space<vmem>>, vector<1x32x1xf32>
    %146 = vector.shape_cast %145 : vector<1x32x1xf32> to vector<32x1xf32>
    %147 = vector.broadcast %146 : vector<32x1xf32> to vector<32x256xf32>
    %148 = arith.addf %144, %147 : vector<32x256xf32>
    %c0_71 = arith.constant 0 : index
    %c0_72 = arith.constant 0 : index
    %c0_73 = arith.constant 0 : index
    %149 = vector.load %arg9[%c0_71, %c0_72, %c0_73] : memref<1x32x256xf32, #tpu.memory_space<vmem>>, vector<1x32x256xf32>
    %150 = vector.shape_cast %149 : vector<1x32x256xf32> to vector<32x256xf32>
    %151 = vector.shape_cast %148 : vector<32x256xf32> to vector<1x32x256xf32>
    tpu.vector_store %arg9[%c0_71, %c0_72, %c0_73], %151 {strides = array<i32>} : memref<1x32x256xf32, #tpu.memory_space<vmem>>, vector<1x32x256xf32>,
    %c3 = arith.constant 3 : index
    %c0_74 = arith.constant 0 : index
    %c0_75 = arith.constant 0 : index
    %152 = vector.load %arg3[%c3, %c0_74, %c0_75] : memref<4x32x32xbf16, #tpu.memory_space<vmem>>, vector<1x32x32xbf16>
    %153 = vector.shape_cast %152 : vector<1x32x32xbf16> to vector<32x32xbf16>
    %154 = arith.truncf %148 : vector<32x256xf32> to vector<32x256xbf16>
    %cst_76 = arith.constant dense<0.000000e+00> : vector<32x256xf32>
    %155 = tpu.matmul %153, %154, %cst_76 {dimension_numbers = #tpu.dot_dimension_numbers<[1], [0], [0], [1], [0, 0, 1, 1], [], []>} : vector<32x32xbf16>, vector<32x256xbf16>, vector<32x256xf32> -> vector<32x256xf32>
    %c3_77 = arith.constant 3 : index
    %c0_78 = arith.constant 0 : index
    %c0_79 = arith.constant 0 : index
    %156 = vector.load %arg4[%c3_77, %c0_78, %c0_79] : memref<4x32x1xf32, #tpu.memory_space<vmem>>, vector<1x32x1xf32>
    %157 = vector.shape_cast %156 : vector<1x32x1xf32> to vector<32x1xf32>
    %158 = vector.broadcast %157 : vector<32x1xf32> to vector<32x256xf32>
    %159 = arith.addf %155, %158 : vector<32x256xf32>
    %160 = arith.mulf %159, %159 : vector<32x256xf32>
    %161 = arith.mulf %159, %160 : vector<32x256xf32>
    %cst_80 = arith.constant 4.471500e-02 : f32
    %162 = vector.broadcast %cst_80 : f32 to vector<32x256xf32>
    %163 = arith.mulf %162, %161 : vector<32x256xf32>
    %164 = arith.addf %159, %163 : vector<32x256xf32>
    %cst_81 = arith.constant 0.797884583 : f32
    %165 = vector.broadcast %cst_81 : f32 to vector<32x256xf32>
    %166 = arith.mulf %165, %164 : vector<32x256xf32>
    %167 = math.tanh %166 : vector<32x256xf32>
    %cst_82 = arith.constant 1.000000e+00 : f32
    %168 = vector.broadcast %cst_82 : f32 to vector<32x256xf32>
    %169 = arith.addf %168, %167 : vector<32x256xf32>
    %cst_83 = arith.constant 5.000000e-01 : f32
    %170 = vector.broadcast %cst_83 : f32 to vector<32x256xf32>
    %171 = arith.mulf %170, %169 : vector<32x256xf32>
    %172 = arith.mulf %159, %171 : vector<32x256xf32>
    %cst_84 = arith.constant dense<0.000000e+00> : vector<256xf32>
    %173 = vector.multi_reduction <add>, %172, %cst_84 [0] : vector<32x256xf32> to vector<256xf32>
    %174 = vector.shape_cast %173 : vector<256xf32> to vector<1x256xf32>
    %cst_85 = arith.constant 3.200000e+01 : f32
    %175 = vector.broadcast %cst_85 : f32 to vector<1x256xf32>
    %176 = arith.divf %174, %175 : vector<1x256xf32>
    %177 = vector.broadcast %176 : vector<1x256xf32> to vector<32x256xf32>
    %178 = arith.subf %172, %177 : vector<32x256xf32>
    %179 = arith.mulf %178, %178 : vector<32x256xf32>
    %cst_86 = arith.constant dense<0.000000e+00> : vector<256xf32>
    %180 = vector.multi_reduction <add>, %179, %cst_86 [0] : vector<32x256xf32> to vector<256xf32>
    %181 = vector.shape_cast %180 : vector<256xf32> to vector<1x256xf32>
    %cst_87 = arith.constant 3.200000e+01 : f32
    %182 = vector.broadcast %cst_87 : f32 to vector<1x256xf32>
    %183 = arith.divf %181, %182 : vector<1x256xf32>
    %184 = vector.broadcast %176 : vector<1x256xf32> to vector<32x256xf32>
    %185 = arith.subf %172, %184 : vector<32x256xf32>
    %cst_88 = arith.constant 9.99999974E-6 : f32
    %186 = vector.broadcast %cst_88 : f32 to vector<1x256xf32>
    %187 = arith.addf %183, %186 : vector<1x256xf32>
    %188 = math.rsqrt %187 : vector<1x256xf32>
    %189 = vector.broadcast %188 : vector<1x256xf32> to vector<32x256xf32>
    %190 = arith.mulf %185, %189 : vector<32x256xf32>
    %c3_89 = arith.constant 3 : index
    %c0_90 = arith.constant 0 : index
    %c0_91 = arith.constant 0 : index
    %191 = vector.load %arg5[%c3_89, %c0_90, %c0_91] : memref<4x32x1xf32, #tpu.memory_space<vmem>>, vector<1x32x1xf32>
    %192 = vector.shape_cast %191 : vector<1x32x1xf32> to vector<32x1xf32>
    %193 = vector.broadcast %192 : vector<32x1xf32> to vector<32x256xf32>
    %194 = arith.mulf %190, %193 : vector<32x256xf32>
    %c3_92 = arith.constant 3 : index
    %c0_93 = arith.constant 0 : index
    %c0_94 = arith.constant 0 : index
    %195 = vector.load %arg6[%c3_92, %c0_93, %c0_94] : memref<4x32x1xf32, #tpu.memory_space<vmem>>, vector<1x32x1xf32>
    %196 = vector.shape_cast %195 : vector<1x32x1xf32> to vector<32x1xf32>
    %197 = vector.broadcast %196 : vector<32x1xf32> to vector<32x256xf32>
    %198 = arith.addf %194, %197 : vector<32x256xf32>
    %c0_95 = arith.constant 0 : index
    %c0_96 = arith.constant 0 : index
    %c0_97 = arith.constant 0 : index
    %199 = vector.load %arg10[%c0_95, %c0_96, %c0_97] : memref<1x32x256xf32, #tpu.memory_space<vmem>>, vector<1x32x256xf32>
    %200 = vector.shape_cast %199 : vector<1x32x256xf32> to vector<32x256xf32>
    %201 = vector.shape_cast %198 : vector<32x256xf32> to vector<1x32x256xf32>
    tpu.vector_store %arg10[%c0_95, %c0_96, %c0_97], %201 {strides = array<i32>} : memref<1x32x256xf32, #tpu.memory_space<vmem>>, vector<1x32x256xf32>,
    return
  }
  func.func @transform_0(%arg0: i32, %arg1: i32) -> (i32, i32, i32) {
    %c0_i32 = arith.constant 0 : i32
    %c0_i32_0 = arith.constant 0 : i32
    return %arg0, %c0_i32, %arg1 : i32, i32, i32
  }
  func.func @transform_1(%arg0: i32, %arg1: i32) -> (i32, i32, i32) {
    %c0_i32 = arith.constant 0 : i32
    %c0_i32_0 = arith.constant 0 : i32
    %c0_i32_1 = arith.constant 0 : i32
    %c0_i32_2 = arith.constant 0 : i32
    return %c0_i32, %c0_i32_0, %c0_i32_1 : i32, i32, i32
  }
  func.func @transform_2(%arg0: i32, %arg1: i32) -> (i32, i32, i32) {
    %c0_i32 = arith.constant 0 : i32
    %c0_i32_0 = arith.constant 0 : i32
    %c0_i32_1 = arith.constant 0 : i32
    %c0_i32_2 = arith.constant 0 : i32
    return %c0_i32, %c0_i32_0, %c0_i32_1 : i32, i32, i32
  }
  func.func @transform_3(%arg0: i32, %arg1: i32) -> (i32, i32, i32) {
    %c0_i32 = arith.constant 0 : i32
    %c0_i32_0 = arith.constant 0 : i32
    %c0_i32_1 = arith.constant 0 : i32
    %c0_i32_2 = arith.constant 0 : i32
    return %c0_i32, %c0_i32_0, %c0_i32_1 : i32, i32, i32
  }
  func.func @transform_4(%arg0: i32, %arg1: i32) -> (i32, i32, i32) {
    %c0_i32 = arith.constant 0 : i32
    %c0_i32_0 = arith.constant 0 : i32
    %c0_i32_1 = arith.constant 0 : i32
    %c0_i32_2 = arith.constant 0 : i32
    return %c0_i32, %c0_i32_0, %c0_i32_1 : i32, i32, i32
  }
  func.func @transform_5(%arg0: i32, %arg1: i32) -> (i32, i32, i32) {
    %c0_i32 = arith.constant 0 : i32
    %c0_i32_0 = arith.constant 0 : i32
    return %arg0, %c0_i32, %arg1 : i32, i32, i32
  }
  func.func @transform_6(%arg0: i32, %arg1: i32) -> (i32, i32, i32) {
    %c0_i32 = arith.constant 0 : i32
    %c0_i32_0 = arith.constant 0 : i32
    return %arg0, %c0_i32, %arg1 : i32, i32, i32
  }
  func.func @transform_7(%arg0: i32, %arg1: i32) -> (i32, i32, i32) {
    %c0_i32 = arith.constant 0 : i32
    %c0_i32_0 = arith.constant 0 : i32
    return %arg0, %c0_i32, %arg1 : i32, i32, i32
  }
  func.func @transform_8(%arg0: i32, %arg1: i32) -> (i32, i32, i32) {
    %c0_i32 = arith.constant 0 : i32
    %c0_i32_0 = arith.constant 0 : i32
    return %arg0, %c0_i32, %arg1 : i32, i32, i32
  }
}

</mosaic_0001>

<llo_original>
// kernel: tpu_custom_call.1
$region0: #{tpu_custom_call.1}
  #allocation0 [shape = 'u32[]', space=smem, size = 0x4, offset = 0x4, fixed_abs, tag = 'smem constant byte address 0x4 - core index']
  #allocation1 [shape = 'u32[144,128]{1,0:T(1,128)}', space=vmem, size = 0x12000, scoped, tag = 'internal scratch']
  %s0 = inlined_call_operand.vmem [shape: f32[2,32,256], index: 0, kind: input, shape index: {}]
  %s1 = inlined_call_operand.vmem [shape: bf16[4,32,32], index: 1, kind: input, shape index: {}]
  %s2 = inlined_call_operand.vmem [shape: f32[4,32,1], index: 2, kind: input, shape index: {}]
  %s3 = inlined_call_operand.vmem [shape: f32[4,32,1], index: 3, kind: input, shape index: {}]
  %s4 = inlined_call_operand.vmem [shape: f32[4,32,1], index: 4, kind: input, shape index: {}]
  %s5 = inlined_call_operand.hbm [shape: f32[2,32,256], index: 5, kind: output, shape index: {0}]
  %s6 = inlined_call_operand.hbm [shape: f32[2,32,256], index: 6, kind: output, shape index: {1}]
  %s7 = inlined_call_operand.hbm [shape: f32[2,32,256], index: 7, kind: output, shape index: {2}]
  %s8 = inlined_call_operand.hbm [shape: f32[2,32,256], index: 8, kind: output, shape index: {3}]
  %9 = xla_tuple %s5, %s6, %s7, %s8
  %s10 = sld [smem:[#allocation0]]
  $region77: #{tpu_custom_call.1} parent=0
    _
  %s12 = ssub.s32 1, %s10
  %s13 = scalar_select 0, %s12, %s10
  $region1: #{tpu_custom_call.1} parent=0
    #allocation2 [shape = 'u8[65536]{0}', space=vmem, size = 0x10000, scoped, tag = 'output window, operand 0']
    #allocation3 [shape = 's32[2]{0}', space=sflag, size = 0x8, scoped, tag = 'scoped memory for tpu_custom_call.1']
    #allocation4 [shape = 'u8[65536]{0}', space=vmem, size = 0x10000, scoped, tag = 'output window, operand 1']
    #allocation5 [shape = 's32[2]{0}', space=sflag, size = 0x8, scoped, tag = 'scoped memory for tpu_custom_call.1']
    #allocation6 [shape = 'u8[65536]{0}', space=vmem, size = 0x10000, scoped, tag = 'output window, operand 2']
    #allocation7 [shape = 'u8[65536]{0}', space=vmem, size = 0x10000, scoped, tag = 'output window, operand 3']
    #allocation8 [shape = 's32[2]{0}', space=sflag, size = 0x8, scoped, tag = 'scoped memory for tpu_custom_call.1']
    %14 = vsyncpa [#allocation3], 0
    %s15 = scalar_lea.sflag [#allocation3], 1
    %16 = vsyncpa %s15, 0
    %17 = vsyncpa [#allocation5], 0
    %s18 = scalar_lea.sflag [#allocation5], 1
    %19 = vsyncpa %s18, 0
    %20 = vsyncpa [#allocation8], 0
    %s21 = scalar_lea.sflag [#allocation8], 1
    %22 = vsyncpa %s21, 0
    loop: start=0, step=1, limit=4
    $region2: #{tpu_custom_call.1} parent=1 // loop_pre_header
      _
    $region3: #{tpu_custom_call.1} parent=1 // loop_header
      %s24 = sphi 0, %s28
      %p25 = scmp.ge.s32.totalorder %s24, 4
      %s31 = sphi 0, %s43
      %s32 = sphi 0, %s39
      %s33 = sphi 0, %s31
      %s34 = sphi 0, %s32
      %s35 = sphi 0, %s33
      %s36 = sphi 0, %s34
      %s48 = sphi 0, %s50
      %s51 = sphi 0, %s48
      %s52 = sphi 0, %s51
      %s68 = sphi 0, %s52
      %s72 = sphi 0, %s72
      %s74 = sphi 0, %s72
      %s75 = sphi 0, %s74
      %s89 = sphi 0, %s75
      %s93 = sphi 0, %s93
      %s95 = sphi 0, %s93
      %s96 = sphi 0, %s95
      %s110 = sphi 0, %s96
      %s114 = sphi 0, %s114
      %s116 = sphi 0, %s114
      %s117 = sphi 0, %s116
      %s131 = sphi 0, %s117
      %s135 = sphi 0, %s135
      %s137 = sphi 0, %s135
      %s138 = sphi 0, %s137
      %s152 = sphi 0, %s138
      %s160 = sphi 0, %s162
      %s163 = sphi 0, %s160
      %s164 = sphi 0, %s163
      %s180 = sphi 0, %s164
      %s188 = sphi 0, %s190
      %s191 = sphi 0, %s188
      %s192 = sphi 0, %s191
      %s208 = sphi 0, %s192
      %s216 = sphi 0, %s218
      %s219 = sphi 0, %s216
      %s220 = sphi 0, %s219
      %s236 = sphi 0, %s220
      %s244 = sphi 0, %s246
      %s247 = sphi 0, %s244
      %s248 = sphi 0, %s247
      %s264 = sphi 0, %s248
    $region4: #{tpu_custom_call.1} parent=1 // loop_header_branch
      %27 = sbr.rel (%p25) target = $region8
    $region5: #{tpu_custom_call.1} parent=1 // loop_body
      %s29 = ssub.s32 %s24, 1
      %s30 = ssub.s32 %s24, 2
      %s37 = sadd.s32 1, %s32
      %p38 = scmp.ge.s32.totalorder %s37, 1
      %s39 = scalar_select %p38, 0, %s37
      %s40 = sadd.s32 1, %s31
      %s41 = scalar_select %p38, %s40, %s31
      %p42 = scmp.ge.s32.totalorder %s41, 2
      %s43 = scalar_select %p42, 0, %s41
      %s44 = ssub.s32 %s31, %s43
      %s45 = ssub.s32 %s32, %s39
      %s46 = sor.u32 %s44, %s45
      %p47 = scmp.eq.s32.totalorder %s46, 0
      %s49 = sadd.s32 %s48, 1
      %s50 = scalar_select %p47, %s48, %s49
      %p53 = pneg %p47
      %p54 = scmp.eq.s32.totalorder %s24, 1
      %p55 = por %p53, %p54
      %p56 = scmp.ne.s32.totalorder %s48, %s51
      %p57 = scmp.eq.s32.totalorder %s24, 0
      %p58 = por %p56, %p57
      %p59 = scmp.ne.s32.totalorder %s48, %s51
      %p60 = scmp.eq.s32.totalorder %s29, 1
      %p61 = por %p59, %p60
      %p62 = scmp.ne.s32.totalorder %s51, %s52
      %p63 = scmp.eq.s32.totalorder %s29, 0
      %p64 = por %p62, %p63
      %p65 = scmp.ne.s32.totalorder %s51, %s52
      %p66 = scmp.eq.s32.totalorder %s30, 1
      %p67 = por %p65, %p66
      %p69 = scmp.ne.s32.totalorder %s52, %s68
      %p70 = scmp.eq.s32.totalorder %s30, 0
      %p71 = por %p69, %p70
      %s73 = sadd.s32 %s72, 1
      %p76 = scmp.eq.s32.totalorder %s24, 1
      %p77 = scmp.ne.s32.totalorder %s72, %s74
      %p78 = scmp.eq.s32.totalorder %s24, 0
      %p79 = por %p77, %p78
      %p80 = scmp.ne.s32.totalorder %s72, %s74
      %p81 = scmp.eq.s32.totalorder %s29, 1
      %p82 = por %p80, %p81
      %p83 = scmp.ne.s32.totalorder %s74, %s75
      %p84 = scmp.eq.s32.totalorder %s29, 0
      %p85 = por %p83, %p84
      %p86 = scmp.ne.s32.totalorder %s74, %s75
      %p87 = scmp.eq.s32.totalorder %s30, 1
      %p88 = por %p86, %p87
      %p90 = scmp.ne.s32.totalorder %s75, %s89
      %p91 = scmp.eq.s32.totalorder %s30, 0
      %p92 = por %p90, %p91
      %s94 = sadd.s32 %s93, 1
      %p97 = scmp.eq.s32.totalorder %s24, 1
      %p98 = scmp.ne.s32.totalorder %s93, %s95
      %p99 = scmp.eq.s32.totalorder %s24, 0
      %p100 = por %p98, %p99
      %p101 = scmp.ne.s32.totalorder %s93, %s95
      %p102 = scmp.eq.s32.totalorder %s29, 1
      %p103 = por %p101, %p102
      %p104 = scmp.ne.s32.totalorder %s95, %s96
      %p105 = scmp.eq.s32.totalorder %s29, 0
      %p106 = por %p104, %p105
      %p107 = scmp.ne.s32.totalorder %s95, %s96
      %p108 = scmp.eq.s32.totalorder %s30, 1
      %p109 = por %p107, %p108
      %p111 = scmp.ne.s32.totalorder %s96, %s110
      %p112 = scmp.eq.s32.totalorder %s30, 0
      %p113 = por %p111, %p112
      %s115 = sadd.s32 %s114, 1
      %p118 = scmp.eq.s32.totalorder %s24, 1
      %p119 = scmp.ne.s32.totalorder %s114, %s116
      %p120 = scmp.eq.s32.totalorder %s24, 0
      %p121 = por %p119, %p120
      %p122 = scmp.ne.s32.totalorder %s114, %s116
      %p123 = scmp.eq.s32.totalorder %s29, 1
      %p124 = por %p122, %p123
      %p125 = scmp.ne.s32.totalorder %s116, %s117
      %p126 = scmp.eq.s32.totalorder %s29, 0
      %p127 = por %p125, %p126
      %p128 = scmp.ne.s32.totalorder %s116, %s117
      %p129 = scmp.eq.s32.totalorder %s30, 1
      %p130 = por %p128, %p129
      %p132 = scmp.ne.s32.totalorder %s117, %s131
      %p133 = scmp.eq.s32.totalorder %s30, 0
      %p134 = por %p132, %p133
      %s136 = sadd.s32 %s135, 1
      %p139 = scmp.eq.s32.totalorder %s24, 1
      %p140 = scmp.ne.s32.totalorder %s135, %s137
      %p141 = scmp.eq.s32.totalorder %s24, 0
      %p142 = por %p140, %p141
      %p143 = scmp.ne.s32.totalorder %s135, %s137
      %p144 = scmp.eq.s32.totalorder %s29, 1
      %p145 = por %p143, %p144
      %p146 = scmp.ne.s32.totalorder %s137, %s138
      %p147 = scmp.eq.s32.totalorder %s29, 0
      %p148 = por %p146, %p147
      %p149 = scmp.ne.s32.totalorder %s137, %s138
      %p150 = scmp.eq.s32.totalorder %s30, 1
      %p151 = por %p149, %p150
      %p153 = scmp.ne.s32.totalorder %s138, %s152
      %p154 = scmp.eq.s32.totalorder %s30, 0
      %p155 = por %p153, %p154
      %s156 = ssub.s32 %s31, %s43
      %s157 = ssub.s32 %s32, %s39
      %s158 = sor.u32 %s156, %s157
      %p159 = scmp.eq.s32.totalorder %s158, 0
      %s161 = sadd.s32 %s160, 1
      %s162 = scalar_select %p159, %s160, %s161
      %p165 = pneg %p159
      %p166 = scmp.eq.s32.totalorder %s24, 1
      %p167 = por %p165, %p166
      %p168 = scmp.ne.s32.totalorder %s160, %s163
      %p169 = scmp.eq.s32.totalorder %s24, 0
      %p170 = por %p168, %p169
      %p171 = scmp.ne.s32.totalorder %s160, %s163
      %p172 = scmp.eq.s32.totalorder %s29, 1
      %p173 = por %p171, %p172
      %p174 = scmp.ne.s32.totalorder %s163, %s164
      %p175 = scmp.eq.s32.totalorder %s29, 0
      %p176 = por %p174, %p175
      %p177 = scmp.ne.s32.totalorder %s163, %s164
      %p178 = scmp.eq.s32.totalorder %s30, 1
      %p179 = por %p177, %p178
      %p181 = scmp.ne.s32.totalorder %s164, %s180
      %p182 = scmp.eq.s32.totalorder %s30, 0
      %p183 = por %p181, %p182
      %s184 = ssub.s32 %s31, %s43
      %s185 = ssub.s32 %s32, %s39
      %s186 = sor.u32 %s184, %s185
      %p187 = scmp.eq.s32.totalorder %s186, 0
      %s189 = sadd.s32 %s188, 1
      %s190 = scalar_select %p187, %s188, %s189
      %p193 = pneg %p187
      %p194 = scmp.eq.s32.totalorder %s24, 1
      %p195 = por %p193, %p194
      %p196 = scmp.ne.s32.totalorder %s188, %s191
      %p197 = scmp.eq.s32.totalorder %s24, 0
      %p198 = por %p196, %p197
      %p199 = scmp.ne.s32.totalorder %s188, %s191
      %p200 = scmp.eq.s32.totalorder %s29, 1
      %p201 = por %p199, %p200
      %p202 = scmp.ne.s32.totalorder %s191, %s192
      %p203 = scmp.eq.s32.totalorder %s29, 0
      %p204 = por %p202, %p203
      %p205 = scmp.ne.s32.totalorder %s191, %s192
      %p206 = scmp.eq.s32.totalorder %s30, 1
      %p207 = por %p205, %p206
      %p209 = scmp.ne.s32.totalorder %s192, %s208
      %p210 = scmp.eq.s32.totalorder %s30, 0
      %p211 = por %p209, %p210
      %s212 = ssub.s32 %s31, %s43
      %s213 = ssub.s32 %s32, %s39
      %s214 = sor.u32 %s212, %s213
      %p215 = scmp.eq.s32.totalorder %s214, 0
      %s217 = sadd.s32 %s216, 1
      %s218 = scalar_select %p215, %s216, %s217
      %p221 = pneg %p215
      %p222 = scmp.eq.s32.totalorder %s24, 1
      %p223 = por %p221, %p222
      %p224 = scmp.ne.s32.totalorder %s216, %s219
      %p225 = scmp.eq.s32.totalorder %s24, 0
      %p226 = por %p224, %p225
      %p227 = scmp.ne.s32.totalorder %s216, %s219
      %p228 = scmp.eq.s32.totalorder %s29, 1
      %p229 = por %p227, %p228
      %p230 = scmp.ne.s32.totalorder %s219, %s220
      %p231 = scmp.eq.s32.totalorder %s29, 0
      %p232 = por %p230, %p231
      %p233 = scmp.ne.s32.totalorder %s219, %s220
      %p234 = scmp.eq.s32.totalorder %s30, 1
      %p235 = por %p233, %p234
      %p237 = scmp.ne.s32.totalorder %s220, %s236
      %p238 = scmp.eq.s32.totalorder %s30, 0
      %p239 = por %p237, %p238
      %s240 = ssub.s32 %s31, %s43
      %s241 = ssub.s32 %s32, %s39
      %s242 = sor.u32 %s240, %s241
      %p243 = scmp.eq.s32.totalorder %s242, 0
      %s245 = sadd.s32 %s244, 1
      %s246 = scalar_select %p243, %s244, %s245
      %p249 = pneg %p243
      %p250 = scmp.eq.s32.totalorder %s24, 1
      %p251 = por %p249, %p250
      %p252 = scmp.ne.s32.totalorder %s244, %s247
      %p253 = scmp.eq.s32.totalorder %s24, 0
      %p254 = por %p252, %p253
      %p255 = scmp.ne.s32.totalorder %s244, %s247
      %p256 = scmp.eq.s32.totalorder %s29, 1
      %p257 = por %p255, %p256
      %p258 = scmp.ne.s32.totalorder %s247, %s248
      %p259 = scmp.eq.s32.totalorder %s29, 0
      %p260 = por %p258, %p259
      %p261 = scmp.ne.s32.totalorder %s247, %s248
      %p262 = scmp.eq.s32.totalorder %s30, 1
      %p263 = por %p261, %p262
      %p265 = scmp.ne.s32.totalorder %s248, %s264
      %p266 = scmp.eq.s32.totalorder %s30, 0
      %p267 = por %p265, %p266
      %p268 = scmp.le.s32.totalorder 1, %s24
      %p269 = scmp.lt.s32.totalorder %s24, 3
      %p270 = pnand %p268, %p269
      %p271 = pneg %p270
      // Predicated region
      $region9: #{tpu_custom_call.1} parent=5 // pred_check
        _
      $region10: #{tpu_custom_call.1} parent=5 // pred_check_branch
        %273 = sbr.rel (%p270) target = $region12
      $region11: #{tpu_custom_call.1} parent=5 // pred_region
        %s274 = ssub.s32 %s24, 1
        // Predicated region
        $region13: #{tpu_custom_call.1} parent=11 // pred_check
          %p275 = pneg %p85
        $region14: #{tpu_custom_call.1} parent=11 // pred_check_branch
          %277 = sbr.rel (%p275) target = $region16
        $region15: #{tpu_custom_call.1} parent=11 // pred_region
          _
        $region16: #{tpu_custom_call.1} parent=11 // pred_fallthru
          _
        // Predicated region
        $region17: #{tpu_custom_call.1} parent=11 // pred_check
          %p278 = pneg %p106
        $region18: #{tpu_custom_call.1} parent=11 // pred_check_branch
          %280 = sbr.rel (%p278) target = $region20
        $region19: #{tpu_custom_call.1} parent=11 // pred_region
          _
        $region20: #{tpu_custom_call.1} parent=11 // pred_fallthru
          _
        // Predicated region
        $region21: #{tpu_custom_call.1} parent=11 // pred_check
          %p281 = pneg %p127
        $region22: #{tpu_custom_call.1} parent=11 // pred_check_branch
          %283 = sbr.rel (%p281) target = $region24
        $region23: #{tpu_custom_call.1} parent=11 // pred_region
          _
        $region24: #{tpu_custom_call.1} parent=11 // pred_fallthru
          _
        // Predicated region
        $region25: #{tpu_custom_call.1} parent=11 // pred_check
          %p284 = pneg %p148
        $region26: #{tpu_custom_call.1} parent=11 // pred_check_branch
          %286 = sbr.rel (%p284) target = $region28
        $region27: #{tpu_custom_call.1} parent=11 // pred_region
          _
        $region28: #{tpu_custom_call.1} parent=11 // pred_fallthru
          _
      $region12: #{tpu_custom_call.1} parent=5 // pred_fallthru
        _
      %p287 = scmp.lt.s32.totalorder %s24, 2
      // Predicated region
      $region29: #{tpu_custom_call.1} parent=5 // pred_check
        %p288 = pneg %p287
      $region30: #{tpu_custom_call.1} parent=5 // pred_check_branch
        %290 = sbr.rel (%p288) target = $region32
      $region31: #{tpu_custom_call.1} parent=5 // pred_region
        // Predicated region
        $region33: #{tpu_custom_call.1} parent=31 // pred_check
          %p291 = pneg %p58
        $region34: #{tpu_custom_call.1} parent=31 // pred_check_branch
          %293 = sbr.rel (%p291) target = $region36
        $region35: #{tpu_custom_call.1} parent=31 // pred_region
          %s294 = smul.u32 2, %s32
          %p295 = scmp.lt.s32.totalorder %s31, 1
          %s296 = scalar_select %p295, %s31, 1
          %p297 = scmp.lt.s32.totalorder %s294, 1
          %s298 = scalar_select %p297, %s294, 1
          %s299 = smul.addr %s296, 8
          %s300 = sadd.s32 %s298, %s299
          %s301 = smul.addr %s300, 8
          %s302 = scalar_lea.vmem %s0, %s301
          %s303 = smul.u32 2, %s32
        $region36: #{tpu_custom_call.1} parent=31 // pred_fallthru
          _
      $region32: #{tpu_custom_call.1} parent=5 // pred_fallthru
        _
      %p304 = scmp.le.s32.totalorder 1, %s24
      %p305 = scmp.lt.s32.totalorder %s24, 3
      %p306 = pnand %p304, %p305
      %p307 = pneg %p306
      // Predicated region
      $region37: #{tpu_custom_call.1} parent=5 // pred_check
        _
      $region38: #{tpu_custom_call.1} parent=5 // pred_check_branch
        %309 = sbr.rel (%p306) target = $region40
      $region39: #{tpu_custom_call.1} parent=5 // pred_region
        %s310 = ssub.s32 %s24, 1
        %s311 = smul.u32 2, %s34
        %p312 = scmp.lt.s32.totalorder %s33, 1
        %s313 = scalar_select %p312, %s33, 1
        %p314 = scmp.lt.s32.totalorder %s311, 1
        %s315 = scalar_select %p314, %s311, 1
        %s316 = smul.addr %s313, 8
        %s317 = sadd.s32 %s315, %s316
        %s318 = smul.addr %s317, 8
        %s319 = scalar_lea.vmem %s0, %s318
        %p320 = pneg %p64
        %p321 = pneg %p61
        %p322 = pneg %p85
        %p323 = pneg %p82
        %p324 = pneg %p106
        %p325 = pneg %p103
        %p326 = pneg %p127
        %p327 = pneg %p124
        %p328 = pneg %p148
        %p329 = pneg %p145
        %p330 = pneg %p176
        %p331 = pneg %p173
        %s332 = sand.u32 %s163, 1
        %s333 = scalar_lea.sflag [#allocation3], %s332
        %s334 = sand.u32 %s163, 1
        %s335 = smul.addr %s334, 64
        %s336 = scalar_lea.vmem [#allocation2], %s335
        %p337 = pneg %p204
        %p338 = pneg %p201
        %s339 = sand.u32 %s29, 1
        %s340 = scalar_lea.sflag [#allocation5], %s339
        %s341 = sand.u32 %s191, 1
        %s342 = smul.addr %s341, 64
        %s343 = scalar_lea.vmem [#allocation4], %s342
        %p344 = pneg %p232
        %p345 = pneg %p229
        %s346 = sand.u32 %s29, 1
        %s347 = scalar_lea.sflag [#allocation5], %s346
        %s348 = sand.u32 %s219, 1
        %s349 = smul.addr %s348, 64
        %s350 = scalar_lea.vmem [#allocation6], %s349
        %p351 = pneg %p260
        %p352 = pneg %p257
        %s353 = sand.u32 %s247, 1
        %s354 = scalar_lea.sflag [#allocation8], %s353
        %s355 = sand.u32 %s247, 1
        %s356 = smul.addr %s355, 64
        %s357 = scalar_lea.vmem [#allocation7], %s356
        %s358 = smul.u32 2, %s34
        %p359 = scmp.lt.s32.totalorder %s33, 1
        %s360 = scalar_select %p359, %s33, 1
        %p361 = scmp.lt.s32.totalorder %s358, 1
        %s362 = scalar_select %p361, %s358, 1
        %s363 = smul.addr %s360, 8
        %s364 = sadd.s32 %s362, %s363
        %s365 = smul.addr %s364, 8
        %s366 = scalar_lea.vmem %s0, %s365
        %s367 = smul.u32 2, %s34
        %s368 = smul.u32 2, %s34
        %s369 = smul.u32 2, %s34
        %s370 = smul.u32 2, %s34
        %s371 = smul.u32 2, %s34
        %v373 = vld [vmem:[%s366] sm:$0xff]
        %v374 = vld [vmem:[%s366 + $0x8] sm:$0xff]
        %v375 = vld [vmem:[%s366 + $0x10] sm:$0xff]
        %v376 = vld [vmem:[%s366 + $0x18] sm:$0xff]
        %v377 = vld [vmem:[%s366 + $0x20] sm:$0xff]
        %v378 = vld [vmem:[%s366 + $0x28] sm:$0xff]
        %v379 = vld [vmem:[%s366 + $0x30] sm:$0xff]
        %v380 = vld [vmem:[%s366 + $0x38] sm:$0xff]
        %v381 = vld [vmem:[%s1] sm:$0xf]
        %v382 = vld [vmem:[%s1 + $0x4] sm:$0xf]
        %v383 = vld [vmem:[%s1 + $0x8] sm:$0xf]
        %v384 = vld [vmem:[%s1 + $0xc] sm:$0xf]
        %v385 = vpack.c.bf16 %v375, %v373
        %v386 = vpack.c.bf16 %v376, %v374
        %v387 = vpack.c.bf16 %v379, %v377
        %v388 = vpack.c.bf16 %v380, %v378
        %v389 = vld [vmem:[%s2] sm:$0xff]
        %v390 = vld [vmem:[%s2 + $0x8] sm:$0xff]
        %v391 = vld [vmem:[%s2 + $0x10] sm:$0xff]
        %v392 = vld [vmem:[%s2 + $0x18] sm:$0xff]
        %394 = vset.pattern.permute.xlu0 0
        %395 = vperm.xlu0 %394, %v389
        %v396 = vpop.permute.xlu0 %395
        %399 = vset.pattern.permute.xlu0 0
        %400 = vperm.xlu0 %399, %v390
        %v401 = vpop.permute.xlu0 %400
        %404 = vset.pattern.permute.xlu0 0
        %405 = vperm.xlu0 %404, %v391
        %v406 = vpop.permute.xlu0 %405
        %409 = vset.pattern.permute.xlu0 0
        %410 = vperm.xlu0 %409, %v392
        %v411 = vpop.permute.xlu0 %410
        %v417 = vunpack.c.l.b16 %v381
        %v418 = vunpack.c.l.b16 %v382
        %v419 = vunpack.c.l.b16 %v383
        %v420 = vunpack.c.l.b16 %v384
        %v421 = vpack.c.b16 %v418, %v417
        %v422 = vpack.c.b16 %v420, %v419
        %vm423 = vcmask 261120
        %v425 = vsel %vm423, %v421, 0
        %v428 = vsel %vm423, %v422, 0
        %430 = vmatprep.subr.bf16.mxu0 %v386
        %431 = vmatpush1.bf16.msra.mxu0 %v385
        %432 = vmatprep.subr.bf16.mxu0 %v388
        %433 = vmatpush1.bf16.msra.mxu0 %v387
        %434 = vmatprep.subr.bf16.mxu0 0
        %435 = vmatpush1.bf16.msra.mxu0 0
        %436 = vmatprep.subr.bf16.mxu0 0
        %437 = vmatpush1.bf16.msra.mxu0 0
        %438 = vmatprep.subr.bf16.mxu0 0
        %439 = vmatpush1.bf16.msra.mxu0 0
        %440 = vmatprep.subr.bf16.mxu0 0
        %441 = vmatpush1.bf16.msra.mxu0 0
        %442 = vmatprep.subr.bf16.mxu0 0
        %443 = vmatpush1.bf16.msra.mxu0 0
        %444 = vmatprep.subr.bf16.mxu0 0
        %445 = vmatpush1.bf16.msra.mxu0 0
        %446 = vmatprep.subr.bf16.mxu0 0
        %447 = vmatpush1.bf16.msra.mxu0 0
        %448 = vmatprep.subr.bf16.mxu0 0
        %449 = vmatpush1.bf16.msra.mxu0 0
        %450 = vmatprep.subr.bf16.mxu0 0
        %451 = vmatpush1.bf16.msra.mxu0 0
        %452 = vmatprep.subr.bf16.mxu0 0
        %453 = vmatpush1.bf16.msra.mxu0 0
        %454 = vmatprep.subr.bf16.mxu0 0
        %455 = vmatpush1.bf16.msra.mxu0 0
        %456 = vmatprep.subr.bf16.mxu0 0
        %457 = vmatpush1.bf16.msra.mxu0 0
        %458 = vmatprep.subr.bf16.mxu0 0
        %459 = vmatpush1.bf16.msra.mxu0 0
        %460 = vmatprep.subr.bf16.mxu0 0
        %461 = vmatpush1.bf16.msra.mxu0 0
        %462 = vmatprep.mubr.bf16.mxu0 0
        %463 = vmatmul.mubr.bf16.gmra.mrb[0].mxu0 %v425
        %v464 = vpop.f32.mrb[0].mxu0
        %v465 = vadd.f32 %v396, %v464
        %v466 = vpop.f32.mrb[0].mxu0
        %v467 = vadd.f32 %v396, %v466
        %v468 = vpop.f32.mrb[0].mxu0
        %v469 = vadd.f32 %v401, %v468
        %v470 = vpop.f32.mrb[0].mxu0
        %v471 = vadd.f32 %v401, %v470
        %472 = vmatprep.mubr.bf16.mxu0 0
        %473 = vmatmul.mubr.bf16.gmra.mrb[0].mxu0 %v428
        %v474 = vpop.f32.mrb[0].mxu0
        %v475 = vadd.f32 %v406, %v474
        %v476 = vpop.f32.mrb[0].mxu0
        %v477 = vadd.f32 %v406, %v476
        %v478 = vpop.f32.mrb[0].mxu0
        %v479 = vadd.f32 %v411, %v478
        %v480 = vpop.f32.mrb[0].mxu0
        %v481 = vadd.f32 %v411, %v480
        %482 = vdwg.mxu0
        %v483 = vmul.f32 %v465, %v465
        %v484 = vmul.f32 %v467, %v467
        %v485 = vmul.f32 %v469, %v469
        %v486 = vmul.f32 %v471, %v471
        %v487 = vmul.f32 %v475, %v475
        %v488 = vmul.f32 %v477, %v477
        %v489 = vmul.f32 %v479, %v479
        %v490 = vmul.f32 %v481, %v481
        %v491 = vmul.f32 %v465, %v483
        %v492 = vmul.f32 %v467, %v484
        %v493 = vmul.f32 %v469, %v485
        %v494 = vmul.f32 %v471, %v486
        %v495 = vmul.f32 %v475, %v487
        %v496 = vmul.f32 %v477, %v488
        %v497 = vmul.f32 %v479, %v489
        %v498 = vmul.f32 %v481, %v490
        %v499 = vmul.f32 %v491, 0.044715
        %v500 = vmul.f32 %v492, 0.044715
        %v501 = vmul.f32 %v493, 0.044715
        %v502 = vmul.f32 %v494, 0.044715
        %v503 = vmul.f32 %v495, 0.044715
        %v504 = vmul.f32 %v496, 0.044715
        %v505 = vmul.f32 %v497, 0.044715
        %v506 = vmul.f32 %v498, 0.044715
        %v507 = vadd.f32 %v465, %v499
        %v508 = vadd.f32 %v467, %v500
        %v509 = vadd.f32 %v469, %v501
        %v510 = vadd.f32 %v471, %v502
        %v511 = vadd.f32 %v475, %v503
        %v512 = vadd.f32 %v477, %v504
        %v513 = vadd.f32 %v479, %v505
        %v514 = vadd.f32 %v481, %v506
        %v515 = vmul.f32 %v507, 0.7978846
        %v516 = vmul.f32 %v508, 0.7978846
        %v517 = vmul.f32 %v509, 0.7978846
        %v518 = vmul.f32 %v510, 0.7978846
        %v519 = vmul.f32 %v511, 0.7978846
        %v520 = vmul.f32 %v512, 0.7978846
        %v521 = vmul.f32 %v513, 0.7978846
        %v522 = vmul.f32 %v514, 0.7978846
        %v523 = vtanh.pop %v515
        %v524 = vtanh.pop %v516
        %v525 = vtanh.pop %v517
        %v526 = vtanh.pop %v518
        %v527 = vtanh.pop %v519
        %v528 = vtanh.pop %v520
        %v529 = vtanh.pop %v521
        %v530 = vtanh.pop %v522
        %v531 = vadd.f32 %v523, 1.0
        %v532 = vadd.f32 %v524, 1.0
        %v533 = vadd.f32 %v525, 1.0
        %v534 = vadd.f32 %v526, 1.0
        %v535 = vadd.f32 %v527, 1.0
        %v536 = vadd.f32 %v528, 1.0
        %v537 = vadd.f32 %v529, 1.0
        %v538 = vadd.f32 %v530, 1.0
        %v539 = vmul.f32 %v531, 0.5
        %v540 = vmul.f32 %v532, 0.5
        %v541 = vmul.f32 %v533, 0.5
        %v542 = vmul.f32 %v534, 0.5
        %v543 = vmul.f32 %v535, 0.5
        %v544 = vmul.f32 %v536, 0.5
        %v545 = vmul.f32 %v537, 0.5
        %v546 = vmul.f32 %v538, 0.5
        %v547 = vmul.f32 %v465, %v539
        %v548 = vmul.f32 %v467, %v540
        %v549 = vmul.f32 %v469, %v541
        %v550 = vmul.f32 %v471, %v542
        %v551 = vmul.f32 %v475, %v543
        %v552 = vmul.f32 %v477, %v544
        %v553 = vmul.f32 %v479, %v545
        %v554 = vmul.f32 %v481, %v546
        %v555 = vadd.f32 %v547, %v549
        %v556 = vadd.f32 %v555, %v551
        %v557 = vadd.f32 %v556, %v553
        %v558 = vrot.slane %v557, 4
        %v559 = vadd.f32 %v557, %v558
        %v560 = vrot.slane %v559, 2
        %v561 = vadd.f32 %v559, %v560
        %v562 = vrot.slane %v561, 1
        %v563 = vadd.f32 %v561, %v562
        %v564 = vadd.f32 %v548, %v550
        %v565 = vadd.f32 %v564, %v552
        %v566 = vadd.f32 %v565, %v554
        %v567 = vrot.slane %v566, 4
        %v568 = vadd.f32 %v566, %v567
        %v569 = vrot.slane %v568, 2
        %v570 = vadd.f32 %v568, %v569
        %v571 = vrot.slane %v570, 1
        %v572 = vadd.f32 %v570, %v571
        %v573 = vrcp.pop 32.0
        %v574 = vmul.f32 %v563, %v573
        %v575 = vmul.f32 %v572, %v573
        %v576 = vsub.f32 %v547, %v574
        %v577 = vsub.f32 %v548, %v575
        %v578 = vsub.f32 %v549, %v574
        %v579 = vsub.f32 %v550, %v575
        %v580 = vsub.f32 %v551, %v574
        %v581 = vsub.f32 %v552, %v575
        %v582 = vsub.f32 %v553, %v574
        %v583 = vsub.f32 %v554, %v575
        %v584 = vmul.f32 %v576, %v576
        %v585 = vmul.f32 %v577, %v577
        %v586 = vmul.f32 %v578, %v578
        %v587 = vmul.f32 %v579, %v579
        %v588 = vmul.f32 %v580, %v580
        %v589 = vmul.f32 %v581, %v581
        %v590 = vmul.f32 %v582, %v582
        %v591 = vmul.f32 %v583, %v583
        %v592 = vadd.f32 %v584, %v586
        %v593 = vadd.f32 %v592, %v588
        %v594 = vadd.f32 %v593, %v590
        %v595 = vrot.slane %v594, 4
        %v596 = vadd.f32 %v594, %v595
        %v597 = vrot.slane %v596, 2
        %v598 = vadd.f32 %v596, %v597
        %v599 = vrot.slane %v598, 1
        %v600 = vadd.f32 %v598, %v599
        %v601 = vadd.f32 %v585, %v587
        %v602 = vadd.f32 %v601, %v589
        %v603 = vadd.f32 %v602, %v591
        %v604 = vrot.slane %v603, 4
        %v605 = vadd.f32 %v603, %v604
        %v606 = vrot.slane %v605, 2
        %v607 = vadd.f32 %v605, %v606
        %v608 = vrot.slane %v607, 1
        %v609 = vadd.f32 %v607, %v608
        %v610 = vmul.f32 %v600, %v573
        %v611 = vmul.f32 %v609, %v573
        %v612 = vadd.f32 %v610, 1e-05
        %v613 = vadd.f32 %v611, 1e-05
        %v614 = vrsqrt.pop %v612
        %v615 = vrsqrt.pop %v613
        %v616 = vmul.f32 %v576, %v614
        %v617 = vmul.f32 %v577, %v615
        %v618 = vmul.f32 %v578, %v614
        %v619 = vmul.f32 %v579, %v615
        %v620 = vmul.f32 %v580, %v614
        %v621 = vmul.f32 %v581, %v615
        %v622 = vmul.f32 %v582, %v614
        %v623 = vmul.f32 %v583, %v615
        %v624 = vld [vmem:[%s3] sm:$0xff]
        %v625 = vld [vmem:[%s3 + $0x8] sm:$0xff]
        %v626 = vld [vmem:[%s3 + $0x10] sm:$0xff]
        %v627 = vld [vmem:[%s3 + $0x18] sm:$0xff]
        %629 = vset.pattern.permute.xlu0 0
        %630 = vperm.xlu0 %629, %v624
        %v631 = vpop.permute.xlu0 %630
        %634 = vset.pattern.permute.xlu0 0
        %635 = vperm.xlu0 %634, %v625
        %v636 = vpop.permute.xlu0 %635
        %639 = vset.pattern.permute.xlu0 0
        %640 = vperm.xlu0 %639, %v626
        %v641 = vpop.permute.xlu0 %640
        %644 = vset.pattern.permute.xlu0 0
        %645 = vperm.xlu0 %644, %v627
        %v646 = vpop.permute.xlu0 %645
        %v648 = vmul.f32 %v616, %v631
        %v649 = vmul.f32 %v617, %v631
        %v650 = vmul.f32 %v618, %v636
        %v651 = vmul.f32 %v619, %v636
        %v652 = vmul.f32 %v620, %v641
        %v653 = vmul.f32 %v621, %v641
        %v654 = vmul.f32 %v622, %v646
        %v655 = vmul.f32 %v623, %v646
        %v656 = vld [vmem:[%s4] sm:$0xff]
        %v657 = vld [vmem:[%s4 + $0x8] sm:$0xff]
        %v658 = vld [vmem:[%s4 + $0x10] sm:$0xff]
        %v659 = vld [vmem:[%s4 + $0x18] sm:$0xff]
        %661 = vset.pattern.permute.xlu0 0
        %662 = vperm.xlu0 %661, %v656
        %v663 = vpop.permute.xlu0 %662
        %666 = vset.pattern.permute.xlu0 0
        %667 = vperm.xlu0 %666, %v657
        %v668 = vpop.permute.xlu0 %667
        %671 = vset.pattern.permute.xlu0 0
        %672 = vperm.xlu0 %671, %v658
        %v673 = vpop.permute.xlu0 %672
        %676 = vset.pattern.permute.xlu0 0
        %677 = vperm.xlu0 %676, %v659
        %v678 = vpop.permute.xlu0 %677
        %v680 = vadd.f32 %v648, %v663
        %v681 = vadd.f32 %v649, %v663
        %v682 = vadd.f32 %v650, %v668
        %v683 = vadd.f32 %v651, %v668
        %v684 = vadd.f32 %v652, %v673
        %v685 = vadd.f32 %v653, %v673
        %v686 = vadd.f32 %v654, %v678
        %v687 = vadd.f32 %v655, %v678
        %688 = vst [vmem:[%s336] sm:$0xff] %v680
        %689 = vst [vmem:[%s336 + $0x8] sm:$0xff] %v681
        %690 = vst [vmem:[%s336 + $0x10] sm:$0xff] %v682
        %691 = vst [vmem:[%s336 + $0x18] sm:$0xff] %v683
        %692 = vst [vmem:[%s336 + $0x20] sm:$0xff] %v684
        %693 = vst [vmem:[%s336 + $0x28] sm:$0xff] %v685
        %694 = vst [vmem:[%s336 + $0x30] sm:$0xff] %v686
        %695 = vst [vmem:[%s336 + $0x38] sm:$0xff] %v687
        %s696 = scalar_lea.vmem %s1, 16
        %v697 = vld [vmem:[%s696] sm:$0xf]
        %v698 = vld [vmem:[%s696 + $0x4] sm:$0xf]
        %v699 = vld [vmem:[%s696 + $0x8] sm:$0xf]
        %v700 = vld [vmem:[%s696 + $0xc] sm:$0xf]
        %v701 = vpack.c.bf16 %v682, %v680
        %v702 = vpack.c.bf16 %v683, %v681
        %v703 = vpack.c.bf16 %v686, %v684
        %v704 = vpack.c.bf16 %v687, %v685
        %s705 = scalar_lea.vmem %s2, 32
        %v706 = vld [vmem:[%s705] sm:$0xff]
        %v707 = vld [vmem:[%s705 + $0x8] sm:$0xff]
        %v708 = vld [vmem:[%s705 + $0x10] sm:$0xff]
        %v709 = vld [vmem:[%s705 + $0x18] sm:$0xff]
        %711 = vset.pattern.permute.xlu0 0
        %712 = vperm.xlu0 %711, %v706
        %v713 = vpop.permute.xlu0 %712
        %716 = vset.pattern.permute.xlu0 0
        %717 = vperm.xlu0 %716, %v707
        %v718 = vpop.permute.xlu0 %717
        %721 = vset.pattern.permute.xlu0 0
        %722 = vperm.xlu0 %721, %v708
        %v723 = vpop.permute.xlu0 %722
        %726 = vset.pattern.permute.xlu0 0
        %727 = vperm.xlu0 %726, %v709
        %v728 = vpop.permute.xlu0 %727
        %v734 = vunpack.c.l.b16 %v697
        %v735 = vunpack.c.l.b16 %v698
        %v736 = vunpack.c.l.b16 %v699
        %v737 = vunpack.c.l.b16 %v700
        %v738 = vpack.c.b16 %v735, %v734
        %v739 = vpack.c.b16 %v737, %v736
        %v741 = vsel %vm423, %v738, 0
        %v744 = vsel %vm423, %v739, 0
        %746 = vmatprep.subr.bf16.mxu0 %v702
        %747 = vmatpush1.bf16.msra.mxu0 %v701
        %748 = vmatprep.subr.bf16.mxu0 %v704
        %749 = vmatpush1.bf16.msra.mxu0 %v703
        %750 = vmatprep.subr.bf16.mxu0 0
        %751 = vmatpush1.bf16.msra.mxu0 0
        %752 = vmatprep.subr.bf16.mxu0 0
        %753 = vmatpush1.bf16.msra.mxu0 0
        %754 = vmatprep.subr.bf16.mxu0 0
        %755 = vmatpush1.bf16.msra.mxu0 0
        %756 = vmatprep.subr.bf16.mxu0 0
        %757 = vmatpush1.bf16.msra.mxu0 0
        %758 = vmatprep.subr.bf16.mxu0 0
        %759 = vmatpush1.bf16.msra.mxu0 0
        %760 = vmatprep.subr.bf16.mxu0 0
        %761 = vmatpush1.bf16.msra.mxu0 0
        %762 = vmatprep.subr.bf16.mxu0 0
        %763 = vmatpush1.bf16.msra.mxu0 0
        %764 = vmatprep.subr.bf16.mxu0 0
        %765 = vmatpush1.bf16.msra.mxu0 0
        %766 = vmatprep.subr.bf16.mxu0 0
        %767 = vmatpush1.bf16.msra.mxu0 0
        %768 = vmatprep.subr.bf16.mxu0 0
        %769 = vmatpush1.bf16.msra.mxu0 0
        %770 = vmatprep.subr.bf16.mxu0 0
        %771 = vmatpush1.bf16.msra.mxu0 0
        %772 = vmatprep.subr.bf16.mxu0 0
        %773 = vmatpush1.bf16.msra.mxu0 0
        %774 = vmatprep.subr.bf16.mxu0 0
        %775 = vmatpush1.bf16.msra.mxu0 0
        %776 = vmatprep.subr.bf16.mxu0 0
        %777 = vmatpush1.bf16.msra.mxu0 0
        %778 = vmatprep.mubr.bf16.mxu0 0
        %779 = vmatmul.mubr.bf16.gmra.mrb[0].mxu0 %v741
        %v780 = vpop.f32.mrb[0].mxu0
        %v781 = vadd.f32 %v713, %v780
        %v782 = vpop.f32.mrb[0].mxu0
        %v783 = vadd.f32 %v713, %v782
        %v784 = vpop.f32.mrb[0].mxu0
        %v785 = vadd.f32 %v718, %v784
        %v786 = vpop.f32.mrb[0].mxu0
        %v787 = vadd.f32 %v718, %v786
        %788 = vmatprep.mubr.bf16.mxu0 0
        %789 = vmatmul.mubr.bf16.gmra.mrb[0].mxu0 %v744
        %v790 = vpop.f32.mrb[0].mxu0
        %v791 = vadd.f32 %v723, %v790
        %v792 = vpop.f32.mrb[0].mxu0
        %v793 = vadd.f32 %v723, %v792
        %v794 = vpop.f32.mrb[0].mxu0
        %v795 = vadd.f32 %v728, %v794
        %v796 = vpop.f32.mrb[0].mxu0
        %v797 = vadd.f32 %v728, %v796
        %798 = vdwg.mxu0
        %v799 = vmul.f32 %v781, %v781
        %v800 = vmul.f32 %v783, %v783
        %v801 = vmul.f32 %v785, %v785
        %v802 = vmul.f32 %v787, %v787
        %v803 = vmul.f32 %v791, %v791
        %v804 = vmul.f32 %v793, %v793
        %v805 = vmul.f32 %v795, %v795
        %v806 = vmul.f32 %v797, %v797
        %v807 = vmul.f32 %v781, %v799
        %v808 = vmul.f32 %v783, %v800
        %v809 = vmul.f32 %v785, %v801
        %v810 = vmul.f32 %v787, %v802
        %v811 = vmul.f32 %v791, %v803
        %v812 = vmul.f32 %v793, %v804
        %v813 = vmul.f32 %v795, %v805
        %v814 = vmul.f32 %v797, %v806
        %v815 = vmul.f32 %v807, 0.044715
        %v816 = vmul.f32 %v808, 0.044715
        %v817 = vmul.f32 %v809, 0.044715
        %v818 = vmul.f32 %v810, 0.044715
        %v819 = vmul.f32 %v811, 0.044715
        %v820 = vmul.f32 %v812, 0.044715
        %v821 = vmul.f32 %v813, 0.044715
        %v822 = vmul.f32 %v814, 0.044715
        %v823 = vadd.f32 %v781, %v815
        %v824 = vadd.f32 %v783, %v816
        %v825 = vadd.f32 %v785, %v817
        %v826 = vadd.f32 %v787, %v818
        %v827 = vadd.f32 %v791, %v819
        %v828 = vadd.f32 %v793, %v820
        %v829 = vadd.f32 %v795, %v821
        %v830 = vadd.f32 %v797, %v822
        %v831 = vmul.f32 %v823, 0.7978846
        %v832 = vmul.f32 %v824, 0.7978846
        %v833 = vmul.f32 %v825, 0.7978846
        %v834 = vmul.f32 %v826, 0.7978846
        %v835 = vmul.f32 %v827, 0.7978846
        %v836 = vmul.f32 %v828, 0.7978846
        %v837 = vmul.f32 %v829, 0.7978846
        %v838 = vmul.f32 %v830, 0.7978846
        %v839 = vtanh.pop %v831
        %v840 = vtanh.pop %v832
        %v841 = vtanh.pop %v833
        %v842 = vtanh.pop %v834
        %v843 = vtanh.pop %v835
        %v844 = vtanh.pop %v836
        %v845 = vtanh.pop %v837
        %v846 = vtanh.pop %v838
        %v847 = vadd.f32 %v839, 1.0
        %v848 = vadd.f32 %v840, 1.0
        %v849 = vadd.f32 %v841, 1.0
        %v850 = vadd.f32 %v842, 1.0
        %v851 = vadd.f32 %v843, 1.0
        %v852 = vadd.f32 %v844, 1.0
        %v853 = vadd.f32 %v845, 1.0
        %v854 = vadd.f32 %v846, 1.0
        %v855 = vmul.f32 %v847, 0.5
        %v856 = vmul.f32 %v848, 0.5
        %v857 = vmul.f32 %v849, 0.5
        %v858 = vmul.f32 %v850, 0.5
        %v859 = vmul.f32 %v851, 0.5
        %v860 = vmul.f32 %v852, 0.5
        %v861 = vmul.f32 %v853, 0.5
        %v862 = vmul.f32 %v854, 0.5
        %v863 = vmul.f32 %v781, %v855
        %v864 = vmul.f32 %v783, %v856
        %v865 = vmul.f32 %v785, %v857
        %v866 = vmul.f32 %v787, %v858
        %v867 = vmul.f32 %v791, %v859
        %v868 = vmul.f32 %v793, %v860
        %v869 = vmul.f32 %v795, %v861
        %v870 = vmul.f32 %v797, %v862
        %v871 = vadd.f32 %v863, %v865
        %v872 = vadd.f32 %v871, %v867
        %v873 = vadd.f32 %v872, %v869
        %v874 = vrot.slane %v873, 4
        %v875 = vadd.f32 %v873, %v874
        %v876 = vrot.slane %v875, 2
        %v877 = vadd.f32 %v875, %v876
        %v878 = vrot.slane %v877, 1
        %v879 = vadd.f32 %v877, %v878
        %v880 = vadd.f32 %v864, %v866
        %v881 = vadd.f32 %v880, %v868
        %v882 = vadd.f32 %v881, %v870
        %v883 = vrot.slane %v882, 4
        %v884 = vadd.f32 %v882, %v883
        %v885 = vrot.slane %v884, 2
        %v886 = vadd.f32 %v884, %v885
        %v887 = vrot.slane %v886, 1
        %v888 = vadd.f32 %v886, %v887
        %v889 = vmul.f32 %v879, %v573
        %v890 = vmul.f32 %v888, %v573
        %v891 = vsub.f32 %v863, %v889
        %v892 = vsub.f32 %v864, %v890
        %v893 = vsub.f32 %v865, %v889
        %v894 = vsub.f32 %v866, %v890
        %v895 = vsub.f32 %v867, %v889
        %v896 = vsub.f32 %v868, %v890
        %v897 = vsub.f32 %v869, %v889
        %v898 = vsub.f32 %v870, %v890
        %v899 = vmul.f32 %v891, %v891
        %v900 = vmul.f32 %v892, %v892
        %v901 = vmul.f32 %v893, %v893
        %v902 = vmul.f32 %v894, %v894
        %v903 = vmul.f32 %v895, %v895
        %v904 = vmul.f32 %v896, %v896
        %v905 = vmul.f32 %v897, %v897
        %v906 = vmul.f32 %v898, %v898
        %v907 = vadd.f32 %v899, %v901
        %v908 = vadd.f32 %v907, %v903
        %v909 = vadd.f32 %v908, %v905
        %v910 = vrot.slane %v909, 4
        %v911 = vadd.f32 %v909, %v910
        %v912 = vrot.slane %v911, 2
        %v913 = vadd.f32 %v911, %v912
        %v914 = vrot.slane %v913, 1
        %v915 = vadd.f32 %v913, %v914
        %v916 = vadd.f32 %v900, %v902
        %v917 = vadd.f32 %v916, %v904
        %v918 = vadd.f32 %v917, %v906
        %v919 = vrot.slane %v918, 4
        %v920 = vadd.f32 %v918, %v919
        %v921 = vrot.slane %v920, 2
        %v922 = vadd.f32 %v920, %v921
        %v923 = vrot.slane %v922, 1
        %v924 = vadd.f32 %v922, %v923
        %v925 = vmul.f32 %v915, %v573
        %v926 = vmul.f32 %v924, %v573
        %v927 = vadd.f32 %v925, 1e-05
        %v928 = vadd.f32 %v926, 1e-05
        %v929 = vrsqrt.pop %v927
        %v930 = vrsqrt.pop %v928
        %v931 = vmul.f32 %v891, %v929
        %v932 = vmul.f32 %v892, %v930
        %v933 = vmul.f32 %v893, %v929
        %v934 = vmul.f32 %v894, %v930
        %v935 = vmul.f32 %v895, %v929
        %v936 = vmul.f32 %v896, %v930
        %v937 = vmul.f32 %v897, %v929
        %v938 = vmul.f32 %v898, %v930
        %s939 = scalar_lea.vmem %s3, 32
        %v940 = vld [vmem:[%s939] sm:$0xff]
        %v941 = vld [vmem:[%s939 + $0x8] sm:$0xff]
        %v942 = vld [vmem:[%s939 + $0x10] sm:$0xff]
        %v943 = vld [vmem:[%s939 + $0x18] sm:$0xff]
        %945 = vset.pattern.permute.xlu0 0
        %946 = vperm.xlu0 %945, %v940
        %v947 = vpop.permute.xlu0 %946
        %950 = vset.pattern.permute.xlu0 0
        %951 = vperm.xlu0 %950, %v941
        %v952 = vpop.permute.xlu0 %951
        %955 = vset.pattern.permute.xlu0 0
        %956 = vperm.xlu0 %955, %v942
        %v957 = vpop.permute.xlu0 %956
        %960 = vset.pattern.permute.xlu0 0
        %961 = vperm.xlu0 %960, %v943
        %v962 = vpop.permute.xlu0 %961
        %v964 = vmul.f32 %v931, %v947
        %v965 = vmul.f32 %v932, %v947
        %v966 = vmul.f32 %v933, %v952
        %v967 = vmul.f32 %v934, %v952
        %v968 = vmul.f32 %v935, %v957
        %v969 = vmul.f32 %v936, %v957
        %v970 = vmul.f32 %v937, %v962
        %v971 = vmul.f32 %v938, %v962
        %s972 = scalar_lea.vmem %s4, 32
        %v973 = vld [vmem:[%s972] sm:$0xff]
        %v974 = vld [vmem:[%s972 + $0x8] sm:$0xff]
        %v975 = vld [vmem:[%s972 + $0x10] sm:$0xff]
        %v976 = vld [vmem:[%s972 + $0x18] sm:$0xff]
        %978 = vset.pattern.permute.xlu0 0
        %979 = vperm.xlu0 %978, %v973
        %v980 = vpop.permute.xlu0 %979
        %983 = vset.pattern.permute.xlu0 0
        %984 = vperm.xlu0 %983, %v974
        %v985 = vpop.permute.xlu0 %984
        %988 = vset.pattern.permute.xlu0 0
        %989 = vperm.xlu0 %988, %v975
        %v990 = vpop.permute.xlu0 %989
        %993 = vset.pattern.permute.xlu0 0
        %994 = vperm.xlu0 %993, %v976
        %v995 = vpop.permute.xlu0 %994
        %v997 = vadd.f32 %v964, %v980
        %v998 = vadd.f32 %v965, %v980
        %v999 = vadd.f32 %v966, %v985
        %v1000 = vadd.f32 %v967, %v985
        %v1001 = vadd.f32 %v968, %v990
        %v1002 = vadd.f32 %v969, %v990
        %v1003 = vadd.f32 %v970, %v995
        %v1004 = vadd.f32 %v971, %v995
        %1005 = vst [vmem:[%s343] sm:$0xff] %v997
        %1006 = vst [vmem:[%s343 + $0x8] sm:$0xff] %v998
        %1007 = vst [vmem:[%s343 + $0x10] sm:$0xff] %v999
        %1008 = vst [vmem:[%s343 + $0x18] sm:$0xff] %v1000
        %1009 = vst [vmem:[%s343 + $0x20] sm:$0xff] %v1001
        %1010 = vst [vmem:[%s343 + $0x28] sm:$0xff] %v1002
        %1011 = vst [vmem:[%s343 + $0x30] sm:$0xff] %v1003
        %1012 = vst [vmem:[%s343 + $0x38] sm:$0xff] %v1004
        %s1013 = scalar_lea.vmem %s1, 32
        %v1014 = vld [vmem:[%s1013] sm:$0xf]
        %v1015 = vld [vmem:[%s1013 + $0x4] sm:$0xf]
        %v1016 = vld [vmem:[%s1013 + $0x8] sm:$0xf]
        %v1017 = vld [vmem:[%s1013 + $0xc] sm:$0xf]
        %v1018 = vpack.c.bf16 %v999, %v997
        %v1019 = vpack.c.bf16 %v1000, %v998
        %v1020 = vpack.c.bf16 %v1003, %v1001
        %v1021 = vpack.c.bf16 %v1004, %v1002
        %s1022 = scalar_lea.vmem %s2, 64
        %v1023 = vld [vmem:[%s1022] sm:$0xff]
        %v1024 = vld [vmem:[%s1022 + $0x8] sm:$0xff]
        %v1025 = vld [vmem:[%s1022 + $0x10] sm:$0xff]
        %v1026 = vld [vmem:[%s1022 + $0x18] sm:$0xff]
        %1028 = vset.pattern.permute.xlu0 0
        %1029 = vperm.xlu0 %1028, %v1023
        %v1030 = vpop.permute.xlu0 %1029
        %1033 = vset.pattern.permute.xlu0 0
        %1034 = vperm.xlu0 %1033, %v1024
        %v1035 = vpop.permute.xlu0 %1034
        %1038 = vset.pattern.permute.xlu0 0
        %1039 = vperm.xlu0 %1038, %v1025
        %v1040 = vpop.permute.xlu0 %1039
        %1043 = vset.pattern.permute.xlu0 0
        %1044 = vperm.xlu0 %1043, %v1026
        %v1045 = vpop.permute.xlu0 %1044
        %v1051 = vunpack.c.l.b16 %v1014
        %v1052 = vunpack.c.l.b16 %v1015
        %v1053 = vunpack.c.l.b16 %v1016
        %v1054 = vunpack.c.l.b16 %v1017
        %v1055 = vpack.c.b16 %v1052, %v1051
        %v1056 = vpack.c.b16 %v1054, %v1053
        %v1058 = vsel %vm423, %v1055, 0
        %v1061 = vsel %vm423, %v1056, 0
        %1063 = vmatprep.subr.bf16.mxu0 %v1019
        %1064 = vmatpush1.bf16.msra.mxu0 %v1018
        %1065 = vmatprep.subr.bf16.mxu0 %v1021
        %1066 = vmatpush1.bf16.msra.mxu0 %v1020
        %1067 = vmatprep.subr.bf16.mxu0 0
        %1068 = vmatpush1.bf16.msra.mxu0 0
        %1069 = vmatprep.subr.bf16.mxu0 0
        %1070 = vmatpush1.bf16.msra.mxu0 0
        %1071 = vmatprep.subr.bf16.mxu0 0
        %1072 = vmatpush1.bf16.msra.mxu0 0
        %1073 = vmatprep.subr.bf16.mxu0 0
        %1074 = vmatpush1.bf16.msra.mxu0 0
        %1075 = vmatprep.subr.bf16.mxu0 0
        %1076 = vmatpush1.bf16.msra.mxu0 0
        %1077 = vmatprep.subr.bf16.mxu0 0
        %1078 = vmatpush1.bf16.msra.mxu0 0
        %1079 = vmatprep.subr.bf16.mxu0 0
        %1080 = vmatpush1.bf16.msra.mxu0 0
        %1081 = vmatprep.subr.bf16.mxu0 0
        %1082 = vmatpush1.bf16.msra.mxu0 0
        %1083 = vmatprep.subr.bf16.mxu0 0
        %1084 = vmatpush1.bf16.msra.mxu0 0
        %1085 = vmatprep.subr.bf16.mxu0 0
        %1086 = vmatpush1.bf16.msra.mxu0 0
        %1087 = vmatprep.subr.bf16.mxu0 0
        %1088 = vmatpush1.bf16.msra.mxu0 0
        %1089 = vmatprep.subr.bf16.mxu0 0
        %1090 = vmatpush1.bf16.msra.mxu0 0
        %1091 = vmatprep.subr.bf16.mxu0 0
        %1092 = vmatpush1.bf16.msra.mxu0 0
        %1093 = vmatprep.subr.bf16.mxu0 0
        %1094 = vmatpush1.bf16.msra.mxu0 0
        %1095 = vmatprep.mubr.bf16.mxu0 0
        %1096 = vmatmul.mubr.bf16.gmra.mrb[0].mxu0 %v1058
        %v1097 = vpop.f32.mrb[0].mxu0
        %v1098 = vadd.f32 %v1030, %v1097
        %v1099 = vpop.f32.mrb[0].mxu0
        %v1100 = vadd.f32 %v1030, %v1099
        %v1101 = vpop.f32.mrb[0].mxu0
        %v1102 = vadd.f32 %v1035, %v1101
        %v1103 = vpop.f32.mrb[0].mxu0
        %v1104 = vadd.f32 %v1035, %v1103
        %1105 = vmatprep.mubr.bf16.mxu0 0
        %1106 = vmatmul.mubr.bf16.gmra.mrb[0].mxu0 %v1061
        %v1107 = vpop.f32.mrb[0].mxu0
        %v1108 = vadd.f32 %v1040, %v1107
        %v1109 = vpop.f32.mrb[0].mxu0
        %v1110 = vadd.f32 %v1040, %v1109
        %v1111 = vpop.f32.mrb[0].mxu0
        %v1112 = vadd.f32 %v1045, %v1111
        %v1113 = vpop.f32.mrb[0].mxu0
        %v1114 = vadd.f32 %v1045, %v1113
        %1115 = vdwg.mxu0
        %v1116 = vmul.f32 %v1098, %v1098
        %v1117 = vmul.f32 %v1100, %v1100
        %v1118 = vmul.f32 %v1102, %v1102
        %v1119 = vmul.f32 %v1104, %v1104
        %v1120 = vmul.f32 %v1108, %v1108
        %v1121 = vmul.f32 %v1110, %v1110
        %v1122 = vmul.f32 %v1112, %v1112
        %v1123 = vmul.f32 %v1114, %v1114
        %v1124 = vmul.f32 %v1098, %v1116
        %v1125 = vmul.f32 %v1100, %v1117
        %v1126 = vmul.f32 %v1102, %v1118
        %v1127 = vmul.f32 %v1104, %v1119
        %v1128 = vmul.f32 %v1108, %v1120
        %v1129 = vmul.f32 %v1110, %v1121
        %v1130 = vmul.f32 %v1112, %v1122
        %v1131 = vmul.f32 %v1114, %v1123
        %v1132 = vmul.f32 %v1124, 0.044715
        %v1133 = vmul.f32 %v1125, 0.044715
        %v1134 = vmul.f32 %v1126, 0.044715
        %v1135 = vmul.f32 %v1127, 0.044715
        %v1136 = vmul.f32 %v1128, 0.044715
        %v1137 = vmul.f32 %v1129, 0.044715
        %v1138 = vmul.f32 %v1130, 0.044715
        %v1139 = vmul.f32 %v1131, 0.044715
        %v1140 = vadd.f32 %v1098, %v1132
        %v1141 = vadd.f32 %v1100, %v1133
        %v1142 = vadd.f32 %v1102, %v1134
        %v1143 = vadd.f32 %v1104, %v1135
        %v1144 = vadd.f32 %v1108, %v1136
        %v1145 = vadd.f32 %v1110, %v1137
        %v1146 = vadd.f32 %v1112, %v1138
        %v1147 = vadd.f32 %v1114, %v1139
        %v1148 = vmul.f32 %v1140, 0.7978846
        %v1149 = vmul.f32 %v1141, 0.7978846
        %v1150 = vmul.f32 %v1142, 0.7978846
        %v1151 = vmul.f32 %v1143, 0.7978846
        %v1152 = vmul.f32 %v1144, 0.7978846
        %v1153 = vmul.f32 %v1145, 0.7978846
        %v1154 = vmul.f32 %v1146, 0.7978846
        %v1155 = vmul.f32 %v1147, 0.7978846
        %v1156 = vtanh.pop %v1148
        %v1157 = vtanh.pop %v1149
        %v1158 = vtanh.pop %v1150
        %v1159 = vtanh.pop %v1151
        %v1160 = vtanh.pop %v1152
        %v1161 = vtanh.pop %v1153
        %v1162 = vtanh.pop %v1154
        %v1163 = vtanh.pop %v1155
        %v1164 = vadd.f32 %v1156, 1.0
        %v1165 = vadd.f32 %v1157, 1.0
        %v1166 = vadd.f32 %v1158, 1.0
        %v1167 = vadd.f32 %v1159, 1.0
        %v1168 = vadd.f32 %v1160, 1.0
        %v1169 = vadd.f32 %v1161, 1.0
        %v1170 = vadd.f32 %v1162, 1.0
        %v1171 = vadd.f32 %v1163, 1.0
        %v1172 = vmul.f32 %v1164, 0.5
        %v1173 = vmul.f32 %v1165, 0.5
        %v1174 = vmul.f32 %v1166, 0.5
        %v1175 = vmul.f32 %v1167, 0.5
        %v1176 = vmul.f32 %v1168, 0.5
        %v1177 = vmul.f32 %v1169, 0.5
        %v1178 = vmul.f32 %v1170, 0.5
        %v1179 = vmul.f32 %v1171, 0.5
        %v1180 = vmul.f32 %v1098, %v1172
        %v1181 = vmul.f32 %v1100, %v1173
        %v1182 = vmul.f32 %v1102, %v1174
        %v1183 = vmul.f32 %v1104, %v1175
        %v1184 = vmul.f32 %v1108, %v1176
        %v1185 = vmul.f32 %v1110, %v1177
        %v1186 = vmul.f32 %v1112, %v1178
        %v1187 = vmul.f32 %v1114, %v1179
        %v1188 = vadd.f32 %v1180, %v1182
        %v1189 = vadd.f32 %v1188, %v1184
        %v1190 = vadd.f32 %v1189, %v1186
        %v1191 = vrot.slane %v1190, 4
        %v1192 = vadd.f32 %v1190, %v1191
        %v1193 = vrot.slane %v1192, 2
        %v1194 = vadd.f32 %v1192, %v1193
        %v1195 = vrot.slane %v1194, 1
        %v1196 = vadd.f32 %v1194, %v1195
        %v1197 = vadd.f32 %v1181, %v1183
        %v1198 = vadd.f32 %v1197, %v1185
        %v1199 = vadd.f32 %v1198, %v1187
        %v1200 = vrot.slane %v1199, 4
        %v1201 = vadd.f32 %v1199, %v1200
        %v1202 = vrot.slane %v1201, 2
        %v1203 = vadd.f32 %v1201, %v1202
        %v1204 = vrot.slane %v1203, 1
        %v1205 = vadd.f32 %v1203, %v1204
        %v1206 = vmul.f32 %v1196, %v573
        %v1207 = vmul.f32 %v1205, %v573
        %v1208 = vsub.f32 %v1180, %v1206
        %v1209 = vsub.f32 %v1181, %v1207
        %v1210 = vsub.f32 %v1182, %v1206
        %v1211 = vsub.f32 %v1183, %v1207
        %v1212 = vsub.f32 %v1184, %v1206
        %v1213 = vsub.f32 %v1185, %v1207
        %v1214 = vsub.f32 %v1186, %v1206
        %v1215 = vsub.f32 %v1187, %v1207
        %v1216 = vmul.f32 %v1208, %v1208
        %v1217 = vmul.f32 %v1209, %v1209
        %v1218 = vmul.f32 %v1210, %v1210
        %v1219 = vmul.f32 %v1211, %v1211
        %v1220 = vmul.f32 %v1212, %v1212
        %v1221 = vmul.f32 %v1213, %v1213
        %v1222 = vmul.f32 %v1214, %v1214
        %v1223 = vmul.f32 %v1215, %v1215
        %v1224 = vadd.f32 %v1216, %v1218
        %v1225 = vadd.f32 %v1224, %v1220
        %v1226 = vadd.f32 %v1225, %v1222
        %v1227 = vrot.slane %v1226, 4
        %v1228 = vadd.f32 %v1226, %v1227
        %v1229 = vrot.slane %v1228, 2
        %v1230 = vadd.f32 %v1228, %v1229
        %v1231 = vrot.slane %v1230, 1
        %v1232 = vadd.f32 %v1230, %v1231
        %v1233 = vadd.f32 %v1217, %v1219
        %v1234 = vadd.f32 %v1233, %v1221
        %v1235 = vadd.f32 %v1234, %v1223
        %v1236 = vrot.slane %v1235, 4
        %v1237 = vadd.f32 %v1235, %v1236
        %v1238 = vrot.slane %v1237, 2
        %v1239 = vadd.f32 %v1237, %v1238
        %v1240 = vrot.slane %v1239, 1
        %v1241 = vadd.f32 %v1239, %v1240
        %v1242 = vmul.f32 %v1232, %v573
        %v1243 = vmul.f32 %v1241, %v573
        %v1244 = vadd.f32 %v1242, 1e-05
        %v1245 = vadd.f32 %v1243, 1e-05
        %v1246 = vrsqrt.pop %v1244
        %v1247 = vrsqrt.pop %v1245
        %v1248 = vmul.f32 %v1208, %v1246
        %v1249 = vmul.f32 %v1209, %v1247
        %v1250 = vmul.f32 %v1210, %v1246
        %v1251 = vmul.f32 %v1211, %v1247
        %v1252 = vmul.f32 %v1212, %v1246
        %v1253 = vmul.f32 %v1213, %v1247
        %v1254 = vmul.f32 %v1214, %v1246
        %v1255 = vmul.f32 %v1215, %v1247
        %s1256 = scalar_lea.vmem %s3, 64
        %v1257 = vld [vmem:[%s1256] sm:$0xff]
        %v1258 = vld [vmem:[%s1256 + $0x8] sm:$0xff]
        %v1259 = vld [vmem:[%s1256 + $0x10] sm:$0xff]
        %v1260 = vld [vmem:[%s1256 + $0x18] sm:$0xff]
        %1262 = vset.pattern.permute.xlu0 0
        %1263 = vperm.xlu0 %1262, %v1257
        %v1264 = vpop.permute.xlu0 %1263
        %1267 = vset.pattern.permute.xlu0 0
        %1268 = vperm.xlu0 %1267, %v1258
        %v1269 = vpop.permute.xlu0 %1268
        %1272 = vset.pattern.permute.xlu0 0
        %1273 = vperm.xlu0 %1272, %v1259
        %v1274 = vpop.permute.xlu0 %1273
        %1277 = vset.pattern.permute.xlu0 0
        %1278 = vperm.xlu0 %1277, %v1260
        %v1279 = vpop.permute.xlu0 %1278
        %v1281 = vmul.f32 %v1248, %v1264
        %v1282 = vmul.f32 %v1249, %v1264
        %v1283 = vmul.f32 %v1250, %v1269
        %v1284 = vmul.f32 %v1251, %v1269
        %v1285 = vmul.f32 %v1252, %v1274
        %v1286 = vmul.f32 %v1253, %v1274
        %v1287 = vmul.f32 %v1254, %v1279
        %v1288 = vmul.f32 %v1255, %v1279
        %s1289 = scalar_lea.vmem %s4, 64
        %v1290 = vld [vmem:[%s1289] sm:$0xff]
        %v1291 = vld [vmem:[%s1289 + $0x8] sm:$0xff]
        %v1292 = vld [vmem:[%s1289 + $0x10] sm:$0xff]
        %v1293 = vld [vmem:[%s1289 + $0x18] sm:$0xff]
        %1295 = vset.pattern.permute.xlu0 0
        %1296 = vperm.xlu0 %1295, %v1290
        %v1297 = vpop.permute.xlu0 %1296
        %1300 = vset.pattern.permute.xlu0 0
        %1301 = vperm.xlu0 %1300, %v1291
        %v1302 = vpop.permute.xlu0 %1301
        %1305 = vset.pattern.permute.xlu0 0
        %1306 = vperm.xlu0 %1305, %v1292
        %v1307 = vpop.permute.xlu0 %1306
        %1310 = vset.pattern.permute.xlu0 0
        %1311 = vperm.xlu0 %1310, %v1293
        %v1312 = vpop.permute.xlu0 %1311
        %v1314 = vadd.f32 %v1281, %v1297
        %v1315 = vadd.f32 %v1282, %v1297
        %v1316 = vadd.f32 %v1283, %v1302
        %v1317 = vadd.f32 %v1284, %v1302
        %v1318 = vadd.f32 %v1285, %v1307
        %v1319 = vadd.f32 %v1286, %v1307
        %v1320 = vadd.f32 %v1287, %v1312
        %v1321 = vadd.f32 %v1288, %v1312
        %1322 = vst [vmem:[%s350] sm:$0xff] %v1314
        %1323 = vst [vmem:[%s350 + $0x8] sm:$0xff] %v1315
        %1324 = vst [vmem:[%s350 + $0x10] sm:$0xff] %v1316
        %1325 = vst [vmem:[%s350 + $0x18] sm:$0xff] %v1317
        %1326 = vst [vmem:[%s350 + $0x20] sm:$0xff] %v1318
        %1327 = vst [vmem:[%s350 + $0x28] sm:$0xff] %v1319
        %1328 = vst [vmem:[%s350 + $0x30] sm:$0xff] %v1320
        %1329 = vst [vmem:[%s350 + $0x38] sm:$0xff] %v1321
        %s1330 = scalar_lea.vmem %s1, 48
        %v1331 = vld [vmem:[%s1330] sm:$0xf]
        %v1332 = vld [vmem:[%s1330 + $0x4] sm:$0xf]
        %v1333 = vld [vmem:[%s1330 + $0x8] sm:$0xf]
        %v1334 = vld [vmem:[%s1330 + $0xc] sm:$0xf]
        %v1335 = vpack.c.bf16 %v1316, %v1314
        %v1336 = vpack.c.bf16 %v1317, %v1315
        %v1337 = vpack.c.bf16 %v1320, %v1318
        %v1338 = vpack.c.bf16 %v1321, %v1319
        %s1339 = scalar_lea.vmem %s2, 96
        %v1340 = vld [vmem:[%s1339] sm:$0xff]
        %v1341 = vld [vmem:[%s1339 + $0x8] sm:$0xff]
        %v1342 = vld [vmem:[%s1339 + $0x10] sm:$0xff]
        %v1343 = vld [vmem:[%s1339 + $0x18] sm:$0xff]
        %1345 = vset.pattern.permute.xlu0 0
        %1346 = vperm.xlu0 %1345, %v1340
        %v1347 = vpop.permute.xlu0 %1346
        %1350 = vset.pattern.permute.xlu0 0
        %1351 = vperm.xlu0 %1350, %v1341
        %v1352 = vpop.permute.xlu0 %1351
        %1355 = vset.pattern.permute.xlu0 0
        %1356 = vperm.xlu0 %1355, %v1342
        %v1357 = vpop.permute.xlu0 %1356
        %1360 = vset.pattern.permute.xlu0 0
        %1361 = vperm.xlu0 %1360, %v1343
        %v1362 = vpop.permute.xlu0 %1361
        %v1368 = vunpack.c.l.b16 %v1331
        %v1369 = vunpack.c.l.b16 %v1332
        %v1370 = vunpack.c.l.b16 %v1333
        %v1371 = vunpack.c.l.b16 %v1334
        %v1372 = vpack.c.b16 %v1369, %v1368
        %v1373 = vpack.c.b16 %v1371, %v1370
        %v1375 = vsel %vm423, %v1372, 0
        %v1378 = vsel %vm423, %v1373, 0
        %1380 = vmatprep.subr.bf16.mxu0 %v1336
        %1381 = vmatpush1.bf16.msra.mxu0 %v1335
        %1382 = vmatprep.subr.bf16.mxu0 %v1338
        %1383 = vmatpush1.bf16.msra.mxu0 %v1337
        %1384 = vmatprep.subr.bf16.mxu0 0
        %1385 = vmatpush1.bf16.msra.mxu0 0
        %1386 = vmatprep.subr.bf16.mxu0 0
        %1387 = vmatpush1.bf16.msra.mxu0 0
        %1388 = vmatprep.subr.bf16.mxu0 0
        %1389 = vmatpush1.bf16.msra.mxu0 0
        %1390 = vmatprep.subr.bf16.mxu0 0
        %1391 = vmatpush1.bf16.msra.mxu0 0
        %1392 = vmatprep.subr.bf16.mxu0 0
        %1393 = vmatpush1.bf16.msra.mxu0 0
        %1394 = vmatprep.subr.bf16.mxu0 0
        %1395 = vmatpush1.bf16.msra.mxu0 0
        %1396 = vmatprep.subr.bf16.mxu0 0
        %1397 = vmatpush1.bf16.msra.mxu0 0
        %1398 = vmatprep.subr.bf16.mxu0 0
        %1399 = vmatpush1.bf16.msra.mxu0 0
        %1400 = vmatprep.subr.bf16.mxu0 0
        %1401 = vmatpush1.bf16.msra.mxu0 0
        %1402 = vmatprep.subr.bf16.mxu0 0
        %1403 = vmatpush1.bf16.msra.mxu0 0
        %1404 = vmatprep.subr.bf16.mxu0 0
        %1405 = vmatpush1.bf16.msra.mxu0 0
        %1406 = vmatprep.subr.bf16.mxu0 0
        %1407 = vmatpush1.bf16.msra.mxu0 0
        %1408 = vmatprep.subr.bf16.mxu0 0
        %1409 = vmatpush1.bf16.msra.mxu0 0
        %1410 = vmatprep.subr.bf16.mxu0 0
        %1411 = vmatpush1.bf16.msra.mxu0 0
        %1412 = vmatprep.mubr.bf16.mxu0 0
        %1413 = vmatmul.mubr.bf16.gmra.mrb[0].mxu0 %v1375
        %v1414 = vpop.f32.mrb[0].mxu0
        %v1415 = vadd.f32 %v1347, %v1414
        %v1416 = vpop.f32.mrb[0].mxu0
        %v1417 = vadd.f32 %v1347, %v1416
        %v1418 = vpop.f32.mrb[0].mxu0
        %v1419 = vadd.f32 %v1352, %v1418
        %v1420 = vpop.f32.mrb[0].mxu0
        %v1421 = vadd.f32 %v1352, %v1420
        %1422 = vmatprep.mubr.bf16.mxu0 0
        %1423 = vmatmul.mubr.bf16.gmra.mrb[0].mxu0 %v1378
        %v1424 = vpop.f32.mrb[0].mxu0
        %v1425 = vadd.f32 %v1357, %v1424
        %v1426 = vpop.f32.mrb[0].mxu0
        %v1427 = vadd.f32 %v1357, %v1426
        %v1428 = vpop.f32.mrb[0].mxu0
        %v1429 = vadd.f32 %v1362, %v1428
        %v1430 = vpop.f32.mrb[0].mxu0
        %v1431 = vadd.f32 %v1362, %v1430
        %1432 = vdwg.mxu0
        %v1433 = vmul.f32 %v1415, %v1415
        %v1434 = vmul.f32 %v1417, %v1417
        %v1435 = vmul.f32 %v1419, %v1419
        %v1436 = vmul.f32 %v1421, %v1421
        %v1437 = vmul.f32 %v1425, %v1425
        %v1438 = vmul.f32 %v1427, %v1427
        %v1439 = vmul.f32 %v1429, %v1429
        %v1440 = vmul.f32 %v1431, %v1431
        %v1441 = vmul.f32 %v1415, %v1433
        %v1442 = vmul.f32 %v1417, %v1434
        %v1443 = vmul.f32 %v1419, %v1435
        %v1444 = vmul.f32 %v1421, %v1436
        %v1445 = vmul.f32 %v1425, %v1437
        %v1446 = vmul.f32 %v1427, %v1438
        %v1447 = vmul.f32 %v1429, %v1439
        %v1448 = vmul.f32 %v1431, %v1440
        %v1449 = vmul.f32 %v1441, 0.044715
        %v1450 = vmul.f32 %v1442, 0.044715
        %v1451 = vmul.f32 %v1443, 0.044715
        %v1452 = vmul.f32 %v1444, 0.044715
        %v1453 = vmul.f32 %v1445, 0.044715
        %v1454 = vmul.f32 %v1446, 0.044715
        %v1455 = vmul.f32 %v1447, 0.044715
        %v1456 = vmul.f32 %v1448, 0.044715
        %v1457 = vadd.f32 %v1415, %v1449
        %v1458 = vadd.f32 %v1417, %v1450
        %v1459 = vadd.f32 %v1419, %v1451
        %v1460 = vadd.f32 %v1421, %v1452
        %v1461 = vadd.f32 %v1425, %v1453
        %v1462 = vadd.f32 %v1427, %v1454
        %v1463 = vadd.f32 %v1429, %v1455
        %v1464 = vadd.f32 %v1431, %v1456
        %v1465 = vmul.f32 %v1457, 0.7978846
        %v1466 = vmul.f32 %v1458, 0.7978846
        %v1467 = vmul.f32 %v1459, 0.7978846
        %v1468 = vmul.f32 %v1460, 0.7978846
        %v1469 = vmul.f32 %v1461, 0.7978846
        %v1470 = vmul.f32 %v1462, 0.7978846
        %v1471 = vmul.f32 %v1463, 0.7978846
        %v1472 = vmul.f32 %v1464, 0.7978846
        %v1473 = vtanh.pop %v1465
        %v1474 = vtanh.pop %v1466
        %v1475 = vtanh.pop %v1467
        %v1476 = vtanh.pop %v1468
        %v1477 = vtanh.pop %v1469
        %v1478 = vtanh.pop %v1470
        %v1479 = vtanh.pop %v1471
        %v1480 = vtanh.pop %v1472
        %v1481 = vadd.f32 %v1473, 1.0
        %v1482 = vadd.f32 %v1474, 1.0
        %v1483 = vadd.f32 %v1475, 1.0
        %v1484 = vadd.f32 %v1476, 1.0
        %v1485 = vadd.f32 %v1477, 1.0
        %v1486 = vadd.f32 %v1478, 1.0
        %v1487 = vadd.f32 %v1479, 1.0
        %v1488 = vadd.f32 %v1480, 1.0
        %v1489 = vmul.f32 %v1481, 0.5
        %v1490 = vmul.f32 %v1482, 0.5
        %v1491 = vmul.f32 %v1483, 0.5
        %v1492 = vmul.f32 %v1484, 0.5
        %v1493 = vmul.f32 %v1485, 0.5
        %v1494 = vmul.f32 %v1486, 0.5
        %v1495 = vmul.f32 %v1487, 0.5
        %v1496 = vmul.f32 %v1488, 0.5
        %v1497 = vmul.f32 %v1415, %v1489
        %v1498 = vmul.f32 %v1417, %v1490
        %v1499 = vmul.f32 %v1419, %v1491
        %v1500 = vmul.f32 %v1421, %v1492
        %v1501 = vmul.f32 %v1425, %v1493
        %v1502 = vmul.f32 %v1427, %v1494
        %v1503 = vmul.f32 %v1429, %v1495
        %v1504 = vmul.f32 %v1431, %v1496
        %v1505 = vadd.f32 %v1497, %v1499
        %v1506 = vadd.f32 %v1505, %v1501
        %v1507 = vadd.f32 %v1506, %v1503
        %v1508 = vrot.slane %v1507, 4
        %v1509 = vadd.f32 %v1507, %v1508
        %v1510 = vrot.slane %v1509, 2
        %v1511 = vadd.f32 %v1509, %v1510
        %v1512 = vrot.slane %v1511, 1
        %v1513 = vadd.f32 %v1511, %v1512
        %v1514 = vadd.f32 %v1498, %v1500
        %v1515 = vadd.f32 %v1514, %v1502
        %v1516 = vadd.f32 %v1515, %v1504
        %v1517 = vrot.slane %v1516, 4
        %v1518 = vadd.f32 %v1516, %v1517
        %v1519 = vrot.slane %v1518, 2
        %v1520 = vadd.f32 %v1518, %v1519
        %v1521 = vrot.slane %v1520, 1
        %v1522 = vadd.f32 %v1520, %v1521
        %v1523 = vmul.f32 %v1513, %v573
        %v1524 = vmul.f32 %v1522, %v573
        %v1525 = vsub.f32 %v1497, %v1523
        %v1526 = vsub.f32 %v1498, %v1524
        %v1527 = vsub.f32 %v1499, %v1523
        %v1528 = vsub.f32 %v1500, %v1524
        %v1529 = vsub.f32 %v1501, %v1523
        %v1530 = vsub.f32 %v1502, %v1524
        %v1531 = vsub.f32 %v1503, %v1523
        %v1532 = vsub.f32 %v1504, %v1524
        %v1533 = vmul.f32 %v1525, %v1525
        %v1534 = vmul.f32 %v1526, %v1526
        %v1535 = vmul.f32 %v1527, %v1527
        %v1536 = vmul.f32 %v1528, %v1528
        %v1537 = vmul.f32 %v1529, %v1529
        %v1538 = vmul.f32 %v1530, %v1530
        %v1539 = vmul.f32 %v1531, %v1531
        %v1540 = vmul.f32 %v1532, %v1532
        %v1541 = vadd.f32 %v1533, %v1535
        %v1542 = vadd.f32 %v1541, %v1537
        %v1543 = vadd.f32 %v1542, %v1539
        %v1544 = vrot.slane %v1543, 4
        %v1545 = vadd.f32 %v1543, %v1544
        %v1546 = vrot.slane %v1545, 2
        %v1547 = vadd.f32 %v1545, %v1546
        %v1548 = vrot.slane %v1547, 1
        %v1549 = vadd.f32 %v1547, %v1548
        %v1550 = vadd.f32 %v1534, %v1536
        %v1551 = vadd.f32 %v1550, %v1538
        %v1552 = vadd.f32 %v1551, %v1540
        %v1553 = vrot.slane %v1552, 4
        %v1554 = vadd.f32 %v1552, %v1553
        %v1555 = vrot.slane %v1554, 2
        %v1556 = vadd.f32 %v1554, %v1555
        %v1557 = vrot.slane %v1556, 1
        %v1558 = vadd.f32 %v1556, %v1557
        %v1559 = vmul.f32 %v1549, %v573
        %v1560 = vmul.f32 %v1558, %v573
        %v1561 = vadd.f32 %v1559, 1e-05
        %v1562 = vadd.f32 %v1560, 1e-05
        %v1563 = vrsqrt.pop %v1561
        %v1564 = vrsqrt.pop %v1562
        %v1565 = vmul.f32 %v1525, %v1563
        %v1566 = vmul.f32 %v1526, %v1564
        %v1567 = vmul.f32 %v1527, %v1563
        %v1568 = vmul.f32 %v1528, %v1564
        %v1569 = vmul.f32 %v1529, %v1563
        %v1570 = vmul.f32 %v1530, %v1564
        %v1571 = vmul.f32 %v1531, %v1563
        %v1572 = vmul.f32 %v1532, %v1564
        %s1573 = scalar_lea.vmem %s3, 96
        %v1574 = vld [vmem:[%s1573] sm:$0xff]
        %v1575 = vld [vmem:[%s1573 + $0x8] sm:$0xff]
        %v1576 = vld [vmem:[%s1573 + $0x10] sm:$0xff]
        %v1577 = vld [vmem:[%s1573 + $0x18] sm:$0xff]
        %1579 = vset.pattern.permute.xlu0 0
        %1580 = vperm.xlu0 %1579, %v1574
        %v1581 = vpop.permute.xlu0 %1580
        %1584 = vset.pattern.permute.xlu0 0
        %1585 = vperm.xlu0 %1584, %v1575
        %v1586 = vpop.permute.xlu0 %1585
        %1589 = vset.pattern.permute.xlu0 0
        %1590 = vperm.xlu0 %1589, %v1576
        %v1591 = vpop.permute.xlu0 %1590
        %1594 = vset.pattern.permute.xlu0 0
        %1595 = vperm.xlu0 %1594, %v1577
        %v1596 = vpop.permute.xlu0 %1595
        %v1598 = vmul.f32 %v1565, %v1581
        %v1599 = vmul.f32 %v1566, %v1581
        %v1600 = vmul.f32 %v1567, %v1586
        %v1601 = vmul.f32 %v1568, %v1586
        %v1602 = vmul.f32 %v1569, %v1591
        %v1603 = vmul.f32 %v1570, %v1591
        %v1604 = vmul.f32 %v1571, %v1596
        %v1605 = vmul.f32 %v1572, %v1596
        %s1606 = scalar_lea.vmem %s4, 96
        %v1607 = vld [vmem:[%s1606] sm:$0xff]
        %v1608 = vld [vmem:[%s1606 + $0x8] sm:$0xff]
        %v1609 = vld [vmem:[%s1606 + $0x10] sm:$0xff]
        %v1610 = vld [vmem:[%s1606 + $0x18] sm:$0xff]
        %1612 = vset.pattern.permute.xlu0 0
        %1613 = vperm.xlu0 %1612, %v1607
        %v1614 = vpop.permute.xlu0 %1613
        %1617 = vset.pattern.permute.xlu0 0
        %1618 = vperm.xlu0 %1617, %v1608
        %v1619 = vpop.permute.xlu0 %1618
        %1622 = vset.pattern.permute.xlu0 0
        %1623 = vperm.xlu0 %1622, %v1609
        %v1624 = vpop.permute.xlu0 %1623
        %1627 = vset.pattern.permute.xlu0 0
        %1628 = vperm.xlu0 %1627, %v1610
        %v1629 = vpop.permute.xlu0 %1628
        %v1631 = vadd.f32 %v1598, %v1614
        %v1632 = vadd.f32 %v1599, %v1614
        %v1633 = vadd.f32 %v1600, %v1619
        %v1634 = vadd.f32 %v1601, %v1619
        %v1635 = vadd.f32 %v1602, %v1624
        %v1636 = vadd.f32 %v1603, %v1624
        %v1637 = vadd.f32 %v1604, %v1629
        %v1638 = vadd.f32 %v1605, %v1629
        %1639 = vst [vmem:[%s357] sm:$0xff] %v1631
        %1640 = vst [vmem:[%s357 + $0x8] sm:$0xff] %v1632
        %1641 = vst [vmem:[%s357 + $0x10] sm:$0xff] %v1633
        %1642 = vst [vmem:[%s357 + $0x18] sm:$0xff] %v1634
        %1643 = vst [vmem:[%s357 + $0x20] sm:$0xff] %v1635
        %1644 = vst [vmem:[%s357 + $0x28] sm:$0xff] %v1636
        %1645 = vst [vmem:[%s357 + $0x30] sm:$0xff] %v1637
        %1646 = vst [vmem:[%s357 + $0x38] sm:$0xff] %v1638
        %s1647 = sand.u32 %s163, 1
        %s1648 = scalar_lea.sflag [#allocation3], %s1647
        %s1649 = sand.u32 %s163, 1
        %s1650 = smul.addr %s1649, 64
        %s1651 = scalar_lea.vmem [#allocation2], %s1650
        %s1652 = sand.u32 %s29, 1
        %s1653 = scalar_lea.sflag [#allocation5], %s1652
        %s1654 = sand.u32 %s191, 1
        %s1655 = smul.addr %s1654, 64
        %s1656 = scalar_lea.vmem [#allocation4], %s1655
        %s1657 = sand.u32 %s29, 1
        %s1658 = scalar_lea.sflag [#allocation5], %s1657
        %s1659 = sand.u32 %s219, 1
        %s1660 = smul.addr %s1659, 64
        %s1661 = scalar_lea.vmem [#allocation6], %s1660
        %s1662 = sand.u32 %s247, 1
        %s1663 = scalar_lea.sflag [#allocation8], %s1662
        %s1664 = sand.u32 %s247, 1
        %s1665 = smul.addr %s1664, 64
        %s1666 = scalar_lea.vmem [#allocation7], %s1665
        // Predicated region
        $region41: #{tpu_custom_call.1} parent=39 // pred_check
          %p1667 = pneg %p173
        $region42: #{tpu_custom_call.1} parent=39 // pred_check_branch
          %1669 = sbr.rel (%p1667) target = $region44
        $region43: #{tpu_custom_call.1} parent=39 // pred_region
          %s1670 = smul.u32 2, %s34
          %s1672 = ssub.s32 1024, 1024
          %1673 = vsyncadd %s1648, %s1672
          %s1674 = smul.addr %s33, 8
          %s1675 = sadd.s32 %s1670, %s1674
          %s1676 = smul.addr %s1675, 128
          %s1677 = scalar_lea.hbm %s5, %s1676
          %s1678 = sshll.u32 %s1651, 4
          %s1679 = int_to_ptr.vmem [resolvable:$true] %s1678
          %1684 = dma.vmem_to_hbm [thread:$0]  %s1679, 1024, %s1677, %s1648, 256, 256, 16
        $region44: #{tpu_custom_call.1} parent=39 // pred_fallthru
          _
        // Predicated region
        $region45: #{tpu_custom_call.1} parent=39 // pred_check
          %p1685 = pneg %p201
        $region46: #{tpu_custom_call.1} parent=39 // pred_check_branch
          %1687 = sbr.rel (%p1685) target = $region48
        $region47: #{tpu_custom_call.1} parent=39 // pred_region
          %s1688 = smul.u32 2, %s34
          %s1690 = ssub.s32 1024, 1024
          %1691 = vsyncadd %s1653, %s1690
          %s1692 = smul.addr %s33, 8
          %s1693 = sadd.s32 %s1688, %s1692
          %s1694 = smul.addr %s1693, 128
          %s1695 = scalar_lea.hbm %s6, %s1694
          %s1696 = sshll.u32 %s1656, 4
          %s1697 = int_to_ptr.vmem [resolvable:$true] %s1696
          %1702 = dma.vmem_to_hbm [thread:$0]  %s1697, 1024, %s1695, %s1653, 256, 256, 16
        $region48: #{tpu_custom_call.1} parent=39 // pred_fallthru
          _
        // Predicated region
        $region49: #{tpu_custom_call.1} parent=39 // pred_check
          %p1703 = pneg %p229
        $region50: #{tpu_custom_call.1} parent=39 // pred_check_branch
          %1705 = sbr.rel (%p1703) target = $region52
        $region51: #{tpu_custom_call.1} parent=39 // pred_region
          %s1706 = smul.u32 2, %s34
          %s1708 = ssub.s32 1024, 1024
          %1709 = vsyncadd %s1658, %s1708
          %s1710 = smul.addr %s33, 8
          %s1711 = sadd.s32 %s1706, %s1710
          %s1712 = smul.addr %s1711, 128
          %s1713 = scalar_lea.hbm %s7, %s1712
          %s1714 = sshll.u32 %s1661, 4
          %s1715 = int_to_ptr.vmem [resolvable:$true] %s1714
          %1720 = dma.vmem_to_hbm [thread:$0]  %s1715, 1024, %s1713, %s1658, 256, 256, 16
        $region52: #{tpu_custom_call.1} parent=39 // pred_fallthru
          _
        // Predicated region
        $region53: #{tpu_custom_call.1} parent=39 // pred_check
          %p1721 = pneg %p257
        $region54: #{tpu_custom_call.1} parent=39 // pred_check_branch
          %1723 = sbr.rel (%p1721) target = $region56
        $region55: #{tpu_custom_call.1} parent=39 // pred_region
          %s1724 = smul.u32 2, %s34
          %s1726 = ssub.s32 1024, 1024
          %1727 = vsyncadd %s1663, %s1726
          %s1728 = smul.addr %s33, 8
          %s1729 = sadd.s32 %s1724, %s1728
          %s1730 = smul.addr %s1729, 128
          %s1731 = scalar_lea.hbm %s8, %s1730
          %s1732 = sshll.u32 %s1666, 4
          %s1733 = int_to_ptr.vmem [resolvable:$true] %s1732
          %1738 = dma.vmem_to_hbm [thread:$0]  %s1733, 1024, %s1731, %s1663, 256, 256, 16
        $region56: #{tpu_custom_call.1} parent=39 // pred_fallthru
          _
      $region40: #{tpu_custom_call.1} parent=5 // pred_fallthru
        _
      %p1739 = scmp.le.s32.totalorder 2, %s24
      // Predicated region
      $region57: #{tpu_custom_call.1} parent=5 // pred_check
        %p1740 = pneg %p1739
      $region58: #{tpu_custom_call.1} parent=5 // pred_check_branch
        %1742 = sbr.rel (%p1740) target = $region60
      $region59: #{tpu_custom_call.1} parent=5 // pred_region
        %s1743 = ssub.s32 %s24, 2
        // Predicated region
        $region61: #{tpu_custom_call.1} parent=59 // pred_check
          %p1744 = pneg %p179
        $region62: #{tpu_custom_call.1} parent=59 // pred_check_branch
          %1746 = sbr.rel (%p1744) target = $region64
        $region63: #{tpu_custom_call.1} parent=59 // pred_region
          %s1747 = sand.u32 %s164, 1
          %s1748 = scalar_lea.sflag [#allocation3], %s1747
          %s1749 = sand.u32 %s164, 1
          %s1750 = smul.addr %s1749, 64
          %s1751 = scalar_lea.vmem [#allocation2], %s1750
          %1752 = dma.done %s1748, 1024
        $region64: #{tpu_custom_call.1} parent=59 // pred_fallthru
          _
        // Predicated region
        $region65: #{tpu_custom_call.1} parent=59 // pred_check
          %p1753 = pneg %p207
        $region66: #{tpu_custom_call.1} parent=59 // pred_check_branch
          %1755 = sbr.rel (%p1753) target = $region68
        $region67: #{tpu_custom_call.1} parent=59 // pred_region
          %s1756 = sand.u32 %s30, 1
          %s1757 = scalar_lea.sflag [#allocation5], %s1756
          %s1758 = sand.u32 %s192, 1
          %s1759 = smul.addr %s1758, 64
          %s1760 = scalar_lea.vmem [#allocation4], %s1759
          %1761 = dma.done %s1757, 1024
        $region68: #{tpu_custom_call.1} parent=59 // pred_fallthru
          _
        // Predicated region
        $region69: #{tpu_custom_call.1} parent=59 // pred_check
          %p1762 = pneg %p235
        $region70: #{tpu_custom_call.1} parent=59 // pred_check_branch
          %1764 = sbr.rel (%p1762) target = $region72
        $region71: #{tpu_custom_call.1} parent=59 // pred_region
          %s1765 = sand.u32 %s30, 1
          %s1766 = scalar_lea.sflag [#allocation5], %s1765
          %s1767 = sand.u32 %s220, 1
          %s1768 = smul.addr %s1767, 64
          %s1769 = scalar_lea.vmem [#allocation6], %s1768
          %1770 = dma.done %s1766, 1024
        $region72: #{tpu_custom_call.1} parent=59 // pred_fallthru
          _
        // Predicated region
        $region73: #{tpu_custom_call.1} parent=59 // pred_check
          %p1771 = pneg %p263
        $region74: #{tpu_custom_call.1} parent=59 // pred_check_branch
          %1773 = sbr.rel (%p1771) target = $region76
        $region75: #{tpu_custom_call.1} parent=59 // pred_region
          %s1774 = sand.u32 %s248, 1
          %s1775 = scalar_lea.sflag [#allocation8], %s1774
          %s1776 = sand.u32 %s248, 1
          %s1777 = smul.addr %s1776, 64
          %s1778 = scalar_lea.vmem [#allocation7], %s1777
          %1779 = dma.done %s1775, 1024
        $region76: #{tpu_custom_call.1} parent=59 // pred_fallthru
          _
      $region60: #{tpu_custom_call.1} parent=5 // pred_fallthru
        _
    $region6: #{tpu_custom_call.1} parent=1 // loop_footer
      %s28 = sadd.s32 1, %s24
    $region7: #{tpu_custom_call.1} parent=1 // loop_footer_branch
      %23 = sbr.rel target = $region3
    $region8: #{tpu_custom_call.1} parent=1 // loop_exit
      _
    %1780 = vsyncpa [#allocation3], 1
    %s1781 = scalar_lea.sflag [#allocation3], 1
    %1782 = vsyncpa %s1781, 1
    %1783 = vsyncpa [#allocation5], 1
    %s1784 = scalar_lea.sflag [#allocation5], 1
    %1785 = vsyncpa %s1784, 1
    %1786 = vsyncpa [#allocation8], 1
    %s1787 = scalar_lea.sflag [#allocation8], 1
    %1788 = vsyncpa %s1787, 1

</llo_original>
